<compile_context>
chip_gen: v5e
topology: v5e:2x2
jax: 0.10.0
libtpu: 0.0.40
codegen_flags: <defaults>
</compile_context>

<pallas_src>
import math
from functools import partial

import numpy as np
import jax
import jax.numpy as jnp
from jax.experimental import pallas as pl
from jax.experimental.pallas import tpu as pltpu

VOCAB = 50
HIDDEN = 32
EMBED = 128
CELL = 32          # == HIDDEN (torch module default)
SEQ = 8
BATCH = 4
GATES = 3          # [f, i, o] scalar gates per example per direction
assert CELL == HIDDEN

H2 = 2 * HIDDEN            # fused hidden/cell width  [fwd | bwd] = 64
GF0 = 2 * CELL             # column of first forward gate  (64)
GB0 = 2 * CELL + GATES     # column of first backward gate (67)
WIDTH = 128                # slab / working lane width (everything padded to one vreg row)
VPAD = 56                  # vocab rows padded to a sublane multiple
LP_ROWS = 2 * VPAD         # dual (fwd+bwd) lookup-projection rows = 112

# parameter-slab row offsets (all 8-aligned)
A0 = 0                     # lookup-folded x-projection (+bias), dual fwd/bwd      (112 rows)
B0 = A0 + LP_ROWS          # block-diagonal recurrent weights                      (64 rows)
C0 = B0 + H2               # fused output weights [wof ; wob]                      (64 rows)
D0 = C0 + H2               # bo / [hf0|hb0] / [cf0|cb0]                            (8 rows)
SLAB_ROWS = D0 + 8         # 248

# fused pre-activation column layout (width <= 70, padded to 128):
#   [0:32)  forward candidate cell   [32:64) backward candidate cell
#   [64:67) forward f,i,o gates      [67:70) backward f,i,o gates


def lstm_kernel(ids_ref, slab_ref, out_ref, tab_f, tab_b, *, seq, batch):
    S, B = seq, batch
    H, V = HIDDEN, VOCAB

    # ---- one-time loads needed before / during the recurrence ----
    wh = slab_ref[B0:B0 + H2, :].astype(jnp.bfloat16)        # (64,128) block-diag recurrent W
    dsec = slab_ref[D0:D0 + 8, :]                            # (8,128): bo / h0 / c0
    h = jnp.broadcast_to(dsec[1:2, 0:H2], (B, H2))           # (B,64) [hf0 | hb0]
    c = jnp.broadcast_to(dsec[2:3, 0:H2], (B, H2))           # (B,64) [cf0 | cb0]

    # ---- embedding gather + x-projection + bias: ONE "dual" one-hot MXU dot ----
    ids = ids_ref[...]                                       # (S*B,2) int32 [tok(j), tok(S-1-j)]
    lp = slab_ref[A0:A0 + LP_ROWS, :]                        # (112,128) lookup@Wx (+bias)
    col = jax.lax.broadcasted_iota(jnp.int32, (S * B, LP_ROWS), 1)
    tgt = jnp.where(col < VPAD, ids[:, 0:1], ids[:, 1:2] + VPAD)
    onehot = (col == tgt).astype(jnp.float32)                # two 1s per row (fwd + bwd half)
    # row j*B+b already mixes forward position j with backward position S-1-j.
    xstep = jnp.dot(onehot, lp, preferred_element_type=jnp.float32)   # (S*B,128)

    lane = jax.lax.broadcasted_iota(jnp.int32, (1, H2), 1)
    fwd_half = lane < H                                      # lanes [0,32) = forward direction

    # ---- fully unrolled fused forward+backward recurrence: 1 MXU dot / step ----
    for j in range(S):
        ib = S - 1 - j
        # pre-update states (torch Hf_table / Hb_table semantics); tab_b lands at the
        # original (already reversed) position.
        tab_f[j * B:(j + 1) * B, :] = h
        tab_b[ib * B:(ib + 1) * B, :] = h
        pre = (jnp.dot(h.astype(jnp.bfloat16), wh, preferred_element_type=jnp.float32)
               + xstep[j * B:(j + 1) * B, :])                # (B,128)
        gate = jax.nn.sigmoid(pre)                           # one EUP sigmoid (cols 64:70 used)
        cand = jnp.tanh(pre[:, 0:H2])                        # one EUP tanh   (cols 0:64 used)
        f_t = jnp.where(fwd_half, gate[:, GF0 + 0:GF0 + 1], gate[:, GB0 + 0:GB0 + 1])
        i_t = jnp.where(fwd_half, gate[:, GF0 + 1:GF0 + 2], gate[:, GB0 + 1:GB0 + 2])
        o_t = jnp.where(fwd_half, gate[:, GF0 + 2:GF0 + 3], gate[:, GB0 + 2:GB0 + 3])
        c = f_t * c + i_t * cand
        h = o_t * jnp.tanh(c)

    # ---- fused output projection + log-softmax, one lane-dense store ----
    wo = slab_ref[C0:C0 + H2, :]                             # (64,128): [wof ; wob], cols>=V zero
    bo = dsec[0:1, 0:V]                                      # (1,50)
    h_all = jnp.where(fwd_half, tab_f[...], tab_b[...])      # (S*B,64) = [Hf(i) | Hb(i)]
    logits = jnp.dot(h_all, wo, preferred_element_type=jnp.float32)[:, 0:V] + bo
    m = jnp.max(logits, axis=1, keepdims=True)
    shifted = logits - m
    lse = jnp.log(jnp.sum(jnp.exp(shifted), axis=1, keepdims=True))
    out_ref[...] = shifted - lse                             # log(softmax)


def prepare_params(p):
    """One-time parameter fusion: fold embedding table, x-proj weights, biases, recurrent
    weights, output weights and init states into a single (SLAB_ROWS, 128) f32 slab."""
    hi = jax.lax.Precision.HIGHEST
    lut = p["lookup"]
    xfc = jnp.dot(lut, p["wfcx"], precision=hi) + p["bfc"]   # (V, CELL)   fwd candidate cell
    xfg = jnp.dot(lut, p["wfx"], precision=hi) + p["bf"]     # (V, GATES)  fwd gates
    xbc = jnp.dot(lut, p["wbcx"], precision=hi) + p["bbc"]   # (V, CELL)   bwd candidate cell
    xbg = jnp.dot(lut, p["wbx"], precision=hi) + p["bb"]     # (V, GATES)  bwd gates

    slab = jnp.zeros((SLAB_ROWS, WIDTH), jnp.float32)
    # Section A: dual lookup-folded x-projection (+bias). rows [0,50) fwd, [56,106) bwd.
    slab = slab.at[A0:A0 + VOCAB, 0:CELL].set(xfc)
    slab = slab.at[A0:A0 + VOCAB, GF0:GF0 + GATES].set(xfg)
    slab = slab.at[A0 + VPAD:A0 + VPAD + VOCAB, CELL:2 * CELL].set(xbc)
    slab = slab.at[A0 + VPAD:A0 + VPAD + VOCAB, GB0:GB0 + GATES].set(xbg)
    # Section B: block-diagonal recurrent weights (rows 0:32 = hf, rows 32:64 = hb).
    slab = slab.at[B0:B0 + HIDDEN, 0:CELL].set(p["wfch"])
    slab = slab.at[B0:B0 + HIDDEN, GF0:GF0 + GATES].set(p["wfh"])
    slab = slab.at[B0 + HIDDEN:B0 + 2 * HIDDEN, CELL:2 * CELL].set(p["wbch"])
    slab = slab.at[B0 + HIDDEN:B0 + 2 * HIDDEN, GB0:GB0 + GATES].set(p["wbh"])
    # Section C: fused output weights [wof ; wob].
    slab = slab.at[C0:C0 + HIDDEN, 0:VOCAB].set(p["wof"])
    slab = slab.at[C0 + HIDDEN:C0 + 2 * HIDDEN, 0:VOCAB].set(p["wob"])
    # Section D: output bias and initial states.
    slab = slab.at[D0, 0:VOCAB].set(p["bo"][0])
    slab = slab.at[D0 + 1, 0:HIDDEN].set(p["hf0"][0])
    slab = slab.at[D0 + 1, HIDDEN:2 * HIDDEN].set(p["hb0"][0])
    slab = slab.at[D0 + 2, 0:HIDDEN].set(p["cf0"][0])
    slab = slab.at[D0 + 2, HIDDEN:2 * HIDDEN].set(p["cb0"][0])
    return slab


def lstm_forward(input_batch, slab):
    S, B = input_batch.shape
    # dual token ids: column 0 = token at position j, column 1 = token at position S-1-j
    ids_dual = jnp.stack([input_batch, input_batch[::-1]], axis=-1).reshape(S * B, 2)
    ids_dual = ids_dual.astype(jnp.int32)

    vmem = pl.BlockSpec(memory_space=pltpu.MemorySpace.VMEM)
    out_flat = pl.pallas_call(
        partial(lstm_kernel, seq=S, batch=B),
        out_shape=jax.ShapeDtypeStruct((S * B, VOCAB), jnp.float32),
        in_specs=[vmem, vmem],
        out_specs=vmem,
        scratch_shapes=[
            pltpu.VMEM((S * B, H2), jnp.float32),   # pre-update state table (fwd ordering)
            pltpu.VMEM((S * B, H2), jnp.float32),   # pre-update state table (bwd ordering)
        ],
    )(ids_dual, slab)
    return out_flat.reshape(S, B, VOCAB)


def lstm_reference(input_batch, p):
    """Pure-JAX reference mirroring the torch forward (training=False)."""
    S, B = input_batch.shape
    X = jnp.take(p["lookup"], input_batch.reshape(-1), axis=0).reshape(S, B, EMBED)

    def cell(h, c, x, wh, wx, b, wch, wcx, bc):
        gates = h @ wh + x @ wx + b
        f = jax.nn.sigmoid(gates[:, 0:1])
        i = jax.nn.sigmoid(gates[:, 1:2])
        o = jax.nn.sigmoid(gates[:, 2:3])
        ct = jnp.tanh(h @ wch + x @ wcx + bc)
        c_new = f * c + i * ct
        return o * jnp.tanh(c_new), c_new

    hf = jnp.broadcast_to(p["hf0"], (B, HIDDEN))
    cf = jnp.broadcast_to(p["cf0"], (B, HIDDEN))
    hf_tab = []
    for i in range(S):
        hf_tab.append(hf)
        hf, cf = cell(hf, cf, X[i], p["wfh"], p["wfx"], p["bf"],
                      p["wfch"], p["wfcx"], p["bfc"])

    hb = jnp.broadcast_to(p["hb0"], (B, HIDDEN))
    cb = jnp.broadcast_to(p["cb0"], (B, HIDDEN))
    hb_tab = [None] * S
    for i in range(S - 1, -1, -1):
        hb_tab[i] = hb
        hb, cb = cell(hb, cb, X[i], p["wbh"], p["wbx"], p["bb"],
                      p["wbch"], p["wbcx"], p["bbc"])

    outs = []
    for i in range(S):
        logits = hf_tab[i] @ p["wof"] + hb_tab[i] @ p["wob"] + p["bo"]
        outs.append(jax.nn.log_softmax(logits, axis=1))
    return jnp.stack(outs, axis=0)


def init_params(key):
    # reset_parameters(): every parameter ~ U(-stdv, stdv), stdv = 1/sqrt(hidden_size)
    stdv = 1.0 / math.sqrt(HIDDEN)
    shapes = {
        "lookup": (VOCAB, EMBED),
        # forward-cell gate weights, split into the H-rows and E-rows of W_[f|i|o]1
        "wfh": (HIDDEN, 3), "wfx": (EMBED, 3), "bf": (1, 3),
        "wfch": (HIDDEN, CELL), "wfcx": (EMBED, CELL), "bfc": (1, CELL),
        # backward-cell (W_*2)
        "wbh": (HIDDEN, 3), "wbx": (EMBED, 3), "bb": (1, 3),
        "wbch": (HIDDEN, CELL), "wbcx": (EMBED, CELL), "bbc": (1, CELL),
        # output layer, split into the Hf-rows and Hb-rows of self.output
        "wof": (HIDDEN, VOCAB), "wob": (HIDDEN, VOCAB), "bo": (1, VOCAB),
        # initial states
        "hf0": (1, HIDDEN), "cf0": (1, HIDDEN),
        "hb0": (1, HIDDEN), "cb0": (1, HIDDEN),
    }
    params = {}
    for name in sorted(shapes):
        key, sub = jax.random.split(key)
        params[name] = jax.random.uniform(sub, shapes[name], jnp.float32, -stdv, stdv)
    return params, key


if __name__ == "__main__":
    key = jax.random.PRNGKey(0)
    params, key = init_params(key)
    key, sub = jax.random.split(key)
    input_batch = jax.random.randint(sub, (SEQ, BATCH), 0, VOCAB, dtype=jnp.int32)

    # one-time parameter fusion (outside the per-call path)
    slab = jax.block_until_ready(prepare_params(params))

    out = jax.jit(lstm_forward)(input_batch, slab)
    out = jax.block_until_ready(out)
    assert out.shape == (SEQ, BATCH, VOCAB)

    ref = lstm_reference(input_batch, params)
    np.testing.assert_allclose(np.asarray(out), np.asarray(ref), atol=5e-3, rtol=5e-3)

    print("KERNEL_OK")
</pallas_src>

<mosaic_0001>
module attributes {stable_mosaic.version = 11 : i64} {
  func.func @lstm_kernel(%arg0: memref<32x2xi32, #tpu.memory_space<vmem>>, %arg1: memref<248x128xf32, #tpu.memory_space<vmem>>, %arg2: memref<32x50xf32, #tpu.memory_space<vmem>>, %arg3: memref<32x64xf32, #tpu.memory_space<vmem>>, %arg4: memref<32x64xf32, #tpu.memory_space<vmem>>) attributes {dimension_semantics = [], scalar_prefetch = 0 : i64, scratch_operands = 2 : i64, tpu.core_type = #tpu.core_type<tc>} {
    %c112 = arith.constant 112 : index
    %c0 = arith.constant 0 : index
    %0 = vector.load %arg1[%c112, %c0] : memref<248x128xf32, #tpu.memory_space<vmem>>, vector<64x128xf32>
    %1 = arith.truncf %0 : vector<64x128xf32> to vector<64x128xbf16>
    %c240 = arith.constant 240 : index
    %c0_0 = arith.constant 0 : index
    %2 = vector.load %arg1[%c240, %c0_0] : memref<248x128xf32, #tpu.memory_space<vmem>>, vector<8x128xf32>
    %3 = vector.extract_strided_slice %2 {offsets = [1, 0], sizes = [1, 64], strides = [1, 1]} : vector<8x128xf32> to vector<1x64xf32>
    %4 = vector.shape_cast %3 : vector<1x64xf32> to vector<1x64xf32>
    %5 = vector.broadcast %4 : vector<1x64xf32> to vector<4x64xf32>
    %6 = vector.extract_strided_slice %2 {offsets = [2, 0], sizes = [1, 64], strides = [1, 1]} : vector<8x128xf32> to vector<1x64xf32>
    %7 = vector.shape_cast %6 : vector<1x64xf32> to vector<1x64xf32>
    %8 = vector.broadcast %7 : vector<1x64xf32> to vector<4x64xf32>
    %c0_1 = arith.constant 0 : index
    %c0_2 = arith.constant 0 : index
    %9 = vector.load %arg0[%c0_1, %c0_2] : memref<32x2xi32, #tpu.memory_space<vmem>>, vector<32x2xi32>
    %c0_3 = arith.constant 0 : index
    %c0_4 = arith.constant 0 : index
    %10 = vector.load %arg1[%c0_3, %c0_4] : memref<248x128xf32, #tpu.memory_space<vmem>>, vector<112x128xf32>
    %11 = tpu.iota {dimensions = array<i32: 1>} : vector<32x112xi32>
    %c56_i32 = arith.constant 56 : i32
    %12 = vector.broadcast %c56_i32 : i32 to vector<32x112xi32>
    %13 = arith.cmpi slt, %11, %12 : vector<32x112xi32>
    %14 = vector.extract_strided_slice %9 {offsets = [0, 0], sizes = [32, 1], strides = [1, 1]} : vector<32x2xi32> to vector<32x1xi32>
    %15 = vector.extract_strided_slice %9 {offsets = [0, 1], sizes = [32, 1], strides = [1, 1]} : vector<32x2xi32> to vector<32x1xi32>
    %c56_i32_5 = arith.constant 56 : i32
    %16 = vector.broadcast %c56_i32_5 : i32 to vector<32x1xi32>
    %17 = arith.addi %15, %16 : vector<32x1xi32>
    %18 = vector.shape_cast %14 : vector<32x1xi32> to vector<32x1xi32>
    %19 = vector.broadcast %18 : vector<32x1xi32> to vector<32x112xi32>
    %20 = vector.shape_cast %17 : vector<32x1xi32> to vector<32x1xi32>
    %21 = vector.broadcast %20 : vector<32x1xi32> to vector<32x112xi32>
    %22 = arith.select %13, %19, %21 : vector<32x112xi1>, vector<32x112xi32>
    %23 = arith.cmpi eq, %11, %22 : vector<32x112xi32>
    %24 = arith.extui %23 : vector<32x112xi1> to vector<32x112xi32>
    %25 = arith.sitofp %24 : vector<32x112xi32> to vector<32x112xf32>
    %cst = arith.constant dense<0.000000e+00> : vector<32x128xf32>
    %26 = tpu.matmul %25, %10, %cst {dimension_numbers = #tpu.dot_dimension_numbers<[1], [0], [0], [1], [0, 0, 1, 1], [], []>} : vector<32x112xf32>, vector<112x128xf32>, vector<32x128xf32> -> vector<32x128xf32>
    %27 = tpu.iota {dimensions = array<i32: 1>} : vector<1x64xi32>
    %c32_i32 = arith.constant 32 : i32
    %28 = vector.broadcast %c32_i32 : i32 to vector<1x64xi32>
    %29 = arith.cmpi slt, %27, %28 : vector<1x64xi32>
    %c0_6 = arith.constant 0 : index
    %c0_7 = arith.constant 0 : index
    %30 = vector.load %arg3[%c0_6, %c0_7] : memref<32x64xf32, #tpu.memory_space<vmem>>, vector<4x64xf32>
    tpu.vector_store %arg3[%c0_6, %c0_7], %5 {strides = array<i32>} : memref<32x64xf32, #tpu.memory_space<vmem>>, vector<4x64xf32>,
    %c28 = arith.constant 28 : index
    %c0_8 = arith.constant 0 : index
    %31 = vector.load %arg4[%c28, %c0_8] : memref<32x64xf32, #tpu.memory_space<vmem>>, vector<4x64xf32>
    tpu.vector_store %arg4[%c28, %c0_8], %5 {strides = array<i32>} : memref<32x64xf32, #tpu.memory_space<vmem>>, vector<4x64xf32>,
    %32 = arith.truncf %5 : vector<4x64xf32> to vector<4x64xbf16>
    %cst_9 = arith.constant dense<0.000000e+00> : vector<4x128xf32>
    %33 = tpu.matmul %32, %1, %cst_9 {dimension_numbers = #tpu.dot_dimension_numbers<[1], [0], [0], [1], [0, 0, 1, 1], [], []>} : vector<4x64xbf16>, vector<64x128xbf16>, vector<4x128xf32> -> vector<4x128xf32>
    %34 = vector.extract_strided_slice %26 {offsets = [0, 0], sizes = [4, 128], strides = [1, 1]} : vector<32x128xf32> to vector<4x128xf32>
    %35 = arith.addf %33, %34 : vector<4x128xf32>
    %36 = arith.negf %35 : vector<4x128xf32>
    %37 = math.exp %36 : vector<4x128xf32>
    %cst_10 = arith.constant 1.000000e+00 : f32
    %38 = vector.broadcast %cst_10 : f32 to vector<4x128xf32>
    %39 = arith.addf %38, %37 : vector<4x128xf32>
    %40 = arith.divf %38, %39 : vector<4x128xf32>
    %41 = vector.extract_strided_slice %35 {offsets = [0, 0], sizes = [4, 64], strides = [1, 1]} : vector<4x128xf32> to vector<4x64xf32>
    %42 = math.tanh %41 : vector<4x64xf32>
    %43 = vector.extract_strided_slice %40 {offsets = [0, 64], sizes = [4, 1], strides = [1, 1]} : vector<4x128xf32> to vector<4x1xf32>
    %44 = vector.extract_strided_slice %40 {offsets = [0, 67], sizes = [4, 1], strides = [1, 1]} : vector<4x128xf32> to vector<4x1xf32>
    %45 = vector.shape_cast %29 : vector<1x64xi1> to vector<1x64xi1>
    %46 = vector.broadcast %45 : vector<1x64xi1> to vector<4x64xi1>
    %47 = vector.shape_cast %43 : vector<4x1xf32> to vector<4x1xf32>
    %48 = vector.broadcast %47 : vector<4x1xf32> to vector<4x64xf32>
    %49 = vector.shape_cast %44 : vector<4x1xf32> to vector<4x1xf32>
    %50 = vector.broadcast %49 : vector<4x1xf32> to vector<4x64xf32>
    %51 = arith.select %46, %48, %50 : vector<4x64xi1>, vector<4x64xf32>
    %52 = vector.extract_strided_slice %40 {offsets = [0, 65], sizes = [4, 1], strides = [1, 1]} : vector<4x128xf32> to vector<4x1xf32>
    %53 = vector.extract_strided_slice %40 {offsets = [0, 68], sizes = [4, 1], strides = [1, 1]} : vector<4x128xf32> to vector<4x1xf32>
    %54 = vector.shape_cast %29 : vector<1x64xi1> to vector<1x64xi1>
    %55 = vector.broadcast %54 : vector<1x64xi1> to vector<4x64xi1>
    %56 = vector.shape_cast %52 : vector<4x1xf32> to vector<4x1xf32>
    %57 = vector.broadcast %56 : vector<4x1xf32> to vector<4x64xf32>
    %58 = vector.shape_cast %53 : vector<4x1xf32> to vector<4x1xf32>
    %59 = vector.broadcast %58 : vector<4x1xf32> to vector<4x64xf32>
    %60 = arith.select %55, %57, %59 : vector<4x64xi1>, vector<4x64xf32>
    %61 = vector.extract_strided_slice %40 {offsets = [0, 66], sizes = [4, 1], strides = [1, 1]} : vector<4x128xf32> to vector<4x1xf32>
    %62 = vector.extract_strided_slice %40 {offsets = [0, 69], sizes = [4, 1], strides = [1, 1]} : vector<4x128xf32> to vector<4x1xf32>
    %63 = vector.shape_cast %29 : vector<1x64xi1> to vector<1x64xi1>
    %64 = vector.broadcast %63 : vector<1x64xi1> to vector<4x64xi1>
    %65 = vector.shape_cast %61 : vector<4x1xf32> to vector<4x1xf32>
    %66 = vector.broadcast %65 : vector<4x1xf32> to vector<4x64xf32>
    %67 = vector.shape_cast %62 : vector<4x1xf32> to vector<4x1xf32>
    %68 = vector.broadcast %67 : vector<4x1xf32> to vector<4x64xf32>
    %69 = arith.select %64, %66, %68 : vector<4x64xi1>, vector<4x64xf32>
    %70 = arith.mulf %51, %8 : vector<4x64xf32>
    %71 = arith.mulf %60, %42 : vector<4x64xf32>
    %72 = arith.addf %70, %71 : vector<4x64xf32>
    %73 = math.tanh %72 : vector<4x64xf32>
    %74 = arith.mulf %69, %73 : vector<4x64xf32>
    %c4 = arith.constant 4 : index
    %c0_11 = arith.constant 0 : index
    %75 = vector.load %arg3[%c4, %c0_11] : memref<32x64xf32, #tpu.memory_space<vmem>>, vector<4x64xf32>
    tpu.vector_store %arg3[%c4, %c0_11], %74 {strides = array<i32>} : memref<32x64xf32, #tpu.memory_space<vmem>>, vector<4x64xf32>,
    %c24 = arith.constant 24 : index
    %c0_12 = arith.constant 0 : index
    %76 = vector.load %arg4[%c24, %c0_12] : memref<32x64xf32, #tpu.memory_space<vmem>>, vector<4x64xf32>
    tpu.vector_store %arg4[%c24, %c0_12], %74 {strides = array<i32>} : memref<32x64xf32, #tpu.memory_space<vmem>>, vector<4x64xf32>,
    %77 = arith.truncf %74 : vector<4x64xf32> to vector<4x64xbf16>
    %cst_13 = arith.constant dense<0.000000e+00> : vector<4x128xf32>
    %78 = tpu.matmul %77, %1, %cst_13 {dimension_numbers = #tpu.dot_dimension_numbers<[1], [0], [0], [1], [0, 0, 1, 1], [], []>} : vector<4x64xbf16>, vector<64x128xbf16>, vector<4x128xf32> -> vector<4x128xf32>
    %79 = vector.extract_strided_slice %26 {offsets = [4, 0], sizes = [4, 128], strides = [1, 1]} : vector<32x128xf32> to vector<4x128xf32>
    %80 = arith.addf %78, %79 : vector<4x128xf32>
    %81 = arith.negf %80 : vector<4x128xf32>
    %82 = math.exp %81 : vector<4x128xf32>
    %cst_14 = arith.constant 1.000000e+00 : f32
    %83 = vector.broadcast %cst_14 : f32 to vector<4x128xf32>
    %84 = arith.addf %83, %82 : vector<4x128xf32>
    %85 = arith.divf %83, %84 : vector<4x128xf32>
    %86 = vector.extract_strided_slice %80 {offsets = [0, 0], sizes = [4, 64], strides = [1, 1]} : vector<4x128xf32> to vector<4x64xf32>
    %87 = math.tanh %86 : vector<4x64xf32>
    %88 = vector.extract_strided_slice %85 {offsets = [0, 64], sizes = [4, 1], strides = [1, 1]} : vector<4x128xf32> to vector<4x1xf32>
    %89 = vector.extract_strided_slice %85 {offsets = [0, 67], sizes = [4, 1], strides = [1, 1]} : vector<4x128xf32> to vector<4x1xf32>
    %90 = vector.shape_cast %29 : vector<1x64xi1> to vector<1x64xi1>
    %91 = vector.broadcast %90 : vector<1x64xi1> to vector<4x64xi1>
    %92 = vector.shape_cast %88 : vector<4x1xf32> to vector<4x1xf32>
    %93 = vector.broadcast %92 : vector<4x1xf32> to vector<4x64xf32>
    %94 = vector.shape_cast %89 : vector<4x1xf32> to vector<4x1xf32>
    %95 = vector.broadcast %94 : vector<4x1xf32> to vector<4x64xf32>
    %96 = arith.select %91, %93, %95 : vector<4x64xi1>, vector<4x64xf32>
    %97 = vector.extract_strided_slice %85 {offsets = [0, 65], sizes = [4, 1], strides = [1, 1]} : vector<4x128xf32> to vector<4x1xf32>
    %98 = vector.extract_strided_slice %85 {offsets = [0, 68], sizes = [4, 1], strides = [1, 1]} : vector<4x128xf32> to vector<4x1xf32>
    %99 = vector.shape_cast %29 : vector<1x64xi1> to vector<1x64xi1>
    %100 = vector.broadcast %99 : vector<1x64xi1> to vector<4x64xi1>
    %101 = vector.shape_cast %97 : vector<4x1xf32> to vector<4x1xf32>
    %102 = vector.broadcast %101 : vector<4x1xf32> to vector<4x64xf32>
    %103 = vector.shape_cast %98 : vector<4x1xf32> to vector<4x1xf32>
    %104 = vector.broadcast %103 : vector<4x1xf32> to vector<4x64xf32>
    %105 = arith.select %100, %102, %104 : vector<4x64xi1>, vector<4x64xf32>
    %106 = vector.extract_strided_slice %85 {offsets = [0, 66], sizes = [4, 1], strides = [1, 1]} : vector<4x128xf32> to vector<4x1xf32>
    %107 = vector.extract_strided_slice %85 {offsets = [0, 69], sizes = [4, 1], strides = [1, 1]} : vector<4x128xf32> to vector<4x1xf32>
    %108 = vector.shape_cast %29 : vector<1x64xi1> to vector<1x64xi1>
    %109 = vector.broadcast %108 : vector<1x64xi1> to vector<4x64xi1>
    %110 = vector.shape_cast %106 : vector<4x1xf32> to vector<4x1xf32>
    %111 = vector.broadcast %110 : vector<4x1xf32> to vector<4x64xf32>
    %112 = vector.shape_cast %107 : vector<4x1xf32> to vector<4x1xf32>
    %113 = vector.broadcast %112 : vector<4x1xf32> to vector<4x64xf32>
    %114 = arith.select %109, %111, %113 : vector<4x64xi1>, vector<4x64xf32>
    %115 = arith.mulf %96, %72 : vector<4x64xf32>
    %116 = arith.mulf %105, %87 : vector<4x64xf32>
    %117 = arith.addf %115, %116 : vector<4x64xf32>
    %118 = math.tanh %117 : vector<4x64xf32>
    %119 = arith.mulf %114, %118 : vector<4x64xf32>
    %c8 = arith.constant 8 : index
    %c0_15 = arith.constant 0 : index
    %120 = vector.load %arg3[%c8, %c0_15] : memref<32x64xf32, #tpu.memory_space<vmem>>, vector<4x64xf32>
    tpu.vector_store %arg3[%c8, %c0_15], %119 {strides = array<i32>} : memref<32x64xf32, #tpu.memory_space<vmem>>, vector<4x64xf32>,
    %c20 = arith.constant 20 : index
    %c0_16 = arith.constant 0 : index
    %121 = vector.load %arg4[%c20, %c0_16] : memref<32x64xf32, #tpu.memory_space<vmem>>, vector<4x64xf32>
    tpu.vector_store %arg4[%c20, %c0_16], %119 {strides = array<i32>} : memref<32x64xf32, #tpu.memory_space<vmem>>, vector<4x64xf32>,
    %122 = arith.truncf %119 : vector<4x64xf32> to vector<4x64xbf16>
    %cst_17 = arith.constant dense<0.000000e+00> : vector<4x128xf32>
    %123 = tpu.matmul %122, %1, %cst_17 {dimension_numbers = #tpu.dot_dimension_numbers<[1], [0], [0], [1], [0, 0, 1, 1], [], []>} : vector<4x64xbf16>, vector<64x128xbf16>, vector<4x128xf32> -> vector<4x128xf32>
    %124 = vector.extract_strided_slice %26 {offsets = [8, 0], sizes = [4, 128], strides = [1, 1]} : vector<32x128xf32> to vector<4x128xf32>
    %125 = arith.addf %123, %124 : vector<4x128xf32>
    %126 = arith.negf %125 : vector<4x128xf32>
    %127 = math.exp %126 : vector<4x128xf32>
    %cst_18 = arith.constant 1.000000e+00 : f32
    %128 = vector.broadcast %cst_18 : f32 to vector<4x128xf32>
    %129 = arith.addf %128, %127 : vector<4x128xf32>
    %130 = arith.divf %128, %129 : vector<4x128xf32>
    %131 = vector.extract_strided_slice %125 {offsets = [0, 0], sizes = [4, 64], strides = [1, 1]} : vector<4x128xf32> to vector<4x64xf32>
    %132 = math.tanh %131 : vector<4x64xf32>
    %133 = vector.extract_strided_slice %130 {offsets = [0, 64], sizes = [4, 1], strides = [1, 1]} : vector<4x128xf32> to vector<4x1xf32>
    %134 = vector.extract_strided_slice %130 {offsets = [0, 67], sizes = [4, 1], strides = [1, 1]} : vector<4x128xf32> to vector<4x1xf32>
    %135 = vector.shape_cast %29 : vector<1x64xi1> to vector<1x64xi1>
    %136 = vector.broadcast %135 : vector<1x64xi1> to vector<4x64xi1>
    %137 = vector.shape_cast %133 : vector<4x1xf32> to vector<4x1xf32>
    %138 = vector.broadcast %137 : vector<4x1xf32> to vector<4x64xf32>
    %139 = vector.shape_cast %134 : vector<4x1xf32> to vector<4x1xf32>
    %140 = vector.broadcast %139 : vector<4x1xf32> to vector<4x64xf32>
    %141 = arith.select %136, %138, %140 : vector<4x64xi1>, vector<4x64xf32>
    %142 = vector.extract_strided_slice %130 {offsets = [0, 65], sizes = [4, 1], strides = [1, 1]} : vector<4x128xf32> to vector<4x1xf32>
    %143 = vector.extract_strided_slice %130 {offsets = [0, 68], sizes = [4, 1], strides = [1, 1]} : vector<4x128xf32> to vector<4x1xf32>
    %144 = vector.shape_cast %29 : vector<1x64xi1> to vector<1x64xi1>
    %145 = vector.broadcast %144 : vector<1x64xi1> to vector<4x64xi1>
    %146 = vector.shape_cast %142 : vector<4x1xf32> to vector<4x1xf32>
    %147 = vector.broadcast %146 : vector<4x1xf32> to vector<4x64xf32>
    %148 = vector.shape_cast %143 : vector<4x1xf32> to vector<4x1xf32>
    %149 = vector.broadcast %148 : vector<4x1xf32> to vector<4x64xf32>
    %150 = arith.select %145, %147, %149 : vector<4x64xi1>, vector<4x64xf32>
    %151 = vector.extract_strided_slice %130 {offsets = [0, 66], sizes = [4, 1], strides = [1, 1]} : vector<4x128xf32> to vector<4x1xf32>
    %152 = vector.extract_strided_slice %130 {offsets = [0, 69], sizes = [4, 1], strides = [1, 1]} : vector<4x128xf32> to vector<4x1xf32>
    %153 = vector.shape_cast %29 : vector<1x64xi1> to vector<1x64xi1>
    %154 = vector.broadcast %153 : vector<1x64xi1> to vector<4x64xi1>
    %155 = vector.shape_cast %151 : vector<4x1xf32> to vector<4x1xf32>
    %156 = vector.broadcast %155 : vector<4x1xf32> to vector<4x64xf32>
    %157 = vector.shape_cast %152 : vector<4x1xf32> to vector<4x1xf32>
    %158 = vector.broadcast %157 : vector<4x1xf32> to vector<4x64xf32>
    %159 = arith.select %154, %156, %158 : vector<4x64xi1>, vector<4x64xf32>
    %160 = arith.mulf %141, %117 : vector<4x64xf32>
    %161 = arith.mulf %150, %132 : vector<4x64xf32>
    %162 = arith.addf %160, %161 : vector<4x64xf32>
    %163 = math.tanh %162 : vector<4x64xf32>
    %164 = arith.mulf %159, %163 : vector<4x64xf32>
    %c12 = arith.constant 12 : index
    %c0_19 = arith.constant 0 : index
    %165 = vector.load %arg3[%c12, %c0_19] : memref<32x64xf32, #tpu.memory_space<vmem>>, vector<4x64xf32>
    tpu.vector_store %arg3[%c12, %c0_19], %164 {strides = array<i32>} : memref<32x64xf32, #tpu.memory_space<vmem>>, vector<4x64xf32>,
    %c16 = arith.constant 16 : index
    %c0_20 = arith.constant 0 : index
    %166 = vector.load %arg4[%c16, %c0_20] : memref<32x64xf32, #tpu.memory_space<vmem>>, vector<4x64xf32>
    tpu.vector_store %arg4[%c16, %c0_20], %164 {strides = array<i32>} : memref<32x64xf32, #tpu.memory_space<vmem>>, vector<4x64xf32>,
    %167 = arith.truncf %164 : vector<4x64xf32> to vector<4x64xbf16>
    %cst_21 = arith.constant dense<0.000000e+00> : vector<4x128xf32>
    %168 = tpu.matmul %167, %1, %cst_21 {dimension_numbers = #tpu.dot_dimension_numbers<[1], [0], [0], [1], [0, 0, 1, 1], [], []>} : vector<4x64xbf16>, vector<64x128xbf16>, vector<4x128xf32> -> vector<4x128xf32>
    %169 = vector.extract_strided_slice %26 {offsets = [12, 0], sizes = [4, 128], strides = [1, 1]} : vector<32x128xf32> to vector<4x128xf32>
    %170 = arith.addf %168, %169 : vector<4x128xf32>
    %171 = arith.negf %170 : vector<4x128xf32>
    %172 = math.exp %171 : vector<4x128xf32>
    %cst_22 = arith.constant 1.000000e+00 : f32
    %173 = vector.broadcast %cst_22 : f32 to vector<4x128xf32>
    %174 = arith.addf %173, %172 : vector<4x128xf32>
    %175 = arith.divf %173, %174 : vector<4x128xf32>
    %176 = vector.extract_strided_slice %170 {offsets = [0, 0], sizes = [4, 64], strides = [1, 1]} : vector<4x128xf32> to vector<4x64xf32>
    %177 = math.tanh %176 : vector<4x64xf32>
    %178 = vector.extract_strided_slice %175 {offsets = [0, 64], sizes = [4, 1], strides = [1, 1]} : vector<4x128xf32> to vector<4x1xf32>
    %179 = vector.extract_strided_slice %175 {offsets = [0, 67], sizes = [4, 1], strides = [1, 1]} : vector<4x128xf32> to vector<4x1xf32>
    %180 = vector.shape_cast %29 : vector<1x64xi1> to vector<1x64xi1>
    %181 = vector.broadcast %180 : vector<1x64xi1> to vector<4x64xi1>
    %182 = vector.shape_cast %178 : vector<4x1xf32> to vector<4x1xf32>
    %183 = vector.broadcast %182 : vector<4x1xf32> to vector<4x64xf32>
    %184 = vector.shape_cast %179 : vector<4x1xf32> to vector<4x1xf32>
    %185 = vector.broadcast %184 : vector<4x1xf32> to vector<4x64xf32>
    %186 = arith.select %181, %183, %185 : vector<4x64xi1>, vector<4x64xf32>
    %187 = vector.extract_strided_slice %175 {offsets = [0, 65], sizes = [4, 1], strides = [1, 1]} : vector<4x128xf32> to vector<4x1xf32>
    %188 = vector.extract_strided_slice %175 {offsets = [0, 68], sizes = [4, 1], strides = [1, 1]} : vector<4x128xf32> to vector<4x1xf32>
    %189 = vector.shape_cast %29 : vector<1x64xi1> to vector<1x64xi1>
    %190 = vector.broadcast %189 : vector<1x64xi1> to vector<4x64xi1>
    %191 = vector.shape_cast %187 : vector<4x1xf32> to vector<4x1xf32>
    %192 = vector.broadcast %191 : vector<4x1xf32> to vector<4x64xf32>
    %193 = vector.shape_cast %188 : vector<4x1xf32> to vector<4x1xf32>
    %194 = vector.broadcast %193 : vector<4x1xf32> to vector<4x64xf32>
    %195 = arith.select %190, %192, %194 : vector<4x64xi1>, vector<4x64xf32>
    %196 = vector.extract_strided_slice %175 {offsets = [0, 66], sizes = [4, 1], strides = [1, 1]} : vector<4x128xf32> to vector<4x1xf32>
    %197 = vector.extract_strided_slice %175 {offsets = [0, 69], sizes = [4, 1], strides = [1, 1]} : vector<4x128xf32> to vector<4x1xf32>
    %198 = vector.shape_cast %29 : vector<1x64xi1> to vector<1x64xi1>
    %199 = vector.broadcast %198 : vector<1x64xi1> to vector<4x64xi1>
    %200 = vector.shape_cast %196 : vector<4x1xf32> to vector<4x1xf32>
    %201 = vector.broadcast %200 : vector<4x1xf32> to vector<4x64xf32>
    %202 = vector.shape_cast %197 : vector<4x1xf32> to vector<4x1xf32>
    %203 = vector.broadcast %202 : vector<4x1xf32> to vector<4x64xf32>
    %204 = arith.select %199, %201, %203 : vector<4x64xi1>, vector<4x64xf32>
    %205 = arith.mulf %186, %162 : vector<4x64xf32>
    %206 = arith.mulf %195, %177 : vector<4x64xf32>
    %207 = arith.addf %205, %206 : vector<4x64xf32>
    %208 = math.tanh %207 : vector<4x64xf32>
    %209 = arith.mulf %204, %208 : vector<4x64xf32>
    %c16_23 = arith.constant 16 : index
    %c0_24 = arith.constant 0 : index
    %210 = vector.load %arg3[%c16_23, %c0_24] : memref<32x64xf32, #tpu.memory_space<vmem>>, vector<4x64xf32>
    tpu.vector_store %arg3[%c16_23, %c0_24], %209 {strides = array<i32>} : memref<32x64xf32, #tpu.memory_space<vmem>>, vector<4x64xf32>,
    %c12_25 = arith.constant 12 : index
    %c0_26 = arith.constant 0 : index
    %211 = vector.load %arg4[%c12_25, %c0_26] : memref<32x64xf32, #tpu.memory_space<vmem>>, vector<4x64xf32>
    tpu.vector_store %arg4[%c12_25, %c0_26], %209 {strides = array<i32>} : memref<32x64xf32, #tpu.memory_space<vmem>>, vector<4x64xf32>,
    %212 = arith.truncf %209 : vector<4x64xf32> to vector<4x64xbf16>
    %cst_27 = arith.constant dense<0.000000e+00> : vector<4x128xf32>
    %213 = tpu.matmul %212, %1, %cst_27 {dimension_numbers = #tpu.dot_dimension_numbers<[1], [0], [0], [1], [0, 0, 1, 1], [], []>} : vector<4x64xbf16>, vector<64x128xbf16>, vector<4x128xf32> -> vector<4x128xf32>
    %214 = vector.extract_strided_slice %26 {offsets = [16, 0], sizes = [4, 128], strides = [1, 1]} : vector<32x128xf32> to vector<4x128xf32>
    %215 = arith.addf %213, %214 : vector<4x128xf32>
    %216 = arith.negf %215 : vector<4x128xf32>
    %217 = math.exp %216 : vector<4x128xf32>
    %cst_28 = arith.constant 1.000000e+00 : f32
    %218 = vector.broadcast %cst_28 : f32 to vector<4x128xf32>
    %219 = arith.addf %218, %217 : vector<4x128xf32>
    %220 = arith.divf %218, %219 : vector<4x128xf32>
    %221 = vector.extract_strided_slice %215 {offsets = [0, 0], sizes = [4, 64], strides = [1, 1]} : vector<4x128xf32> to vector<4x64xf32>
    %222 = math.tanh %221 : vector<4x64xf32>
    %223 = vector.extract_strided_slice %220 {offsets = [0, 64], sizes = [4, 1], strides = [1, 1]} : vector<4x128xf32> to vector<4x1xf32>
    %224 = vector.extract_strided_slice %220 {offsets = [0, 67], sizes = [4, 1], strides = [1, 1]} : vector<4x128xf32> to vector<4x1xf32>
    %225 = vector.shape_cast %29 : vector<1x64xi1> to vector<1x64xi1>
    %226 = vector.broadcast %225 : vector<1x64xi1> to vector<4x64xi1>
    %227 = vector.shape_cast %223 : vector<4x1xf32> to vector<4x1xf32>
    %228 = vector.broadcast %227 : vector<4x1xf32> to vector<4x64xf32>
    %229 = vector.shape_cast %224 : vector<4x1xf32> to vector<4x1xf32>
    %230 = vector.broadcast %229 : vector<4x1xf32> to vector<4x64xf32>
    %231 = arith.select %226, %228, %230 : vector<4x64xi1>, vector<4x64xf32>
    %232 = vector.extract_strided_slice %220 {offsets = [0, 65], sizes = [4, 1], strides = [1, 1]} : vector<4x128xf32> to vector<4x1xf32>
    %233 = vector.extract_strided_slice %220 {offsets = [0, 68], sizes = [4, 1], strides = [1, 1]} : vector<4x128xf32> to vector<4x1xf32>
    %234 = vector.shape_cast %29 : vector<1x64xi1> to vector<1x64xi1>
    %235 = vector.broadcast %234 : vector<1x64xi1> to vector<4x64xi1>
    %236 = vector.shape_cast %232 : vector<4x1xf32> to vector<4x1xf32>
    %237 = vector.broadcast %236 : vector<4x1xf32> to vector<4x64xf32>
    %238 = vector.shape_cast %233 : vector<4x1xf32> to vector<4x1xf32>
    %239 = vector.broadcast %238 : vector<4x1xf32> to vector<4x64xf32>
    %240 = arith.select %235, %237, %239 : vector<4x64xi1>, vector<4x64xf32>
    %241 = vector.extract_strided_slice %220 {offsets = [0, 66], sizes = [4, 1], strides = [1, 1]} : vector<4x128xf32> to vector<4x1xf32>
    %242 = vector.extract_strided_slice %220 {offsets = [0, 69], sizes = [4, 1], strides = [1, 1]} : vector<4x128xf32> to vector<4x1xf32>
    %243 = vector.shape_cast %29 : vector<1x64xi1> to vector<1x64xi1>
    %244 = vector.broadcast %243 : vector<1x64xi1> to vector<4x64xi1>
    %245 = vector.shape_cast %241 : vector<4x1xf32> to vector<4x1xf32>
    %246 = vector.broadcast %245 : vector<4x1xf32> to vector<4x64xf32>
    %247 = vector.shape_cast %242 : vector<4x1xf32> to vector<4x1xf32>
    %248 = vector.broadcast %247 : vector<4x1xf32> to vector<4x64xf32>
    %249 = arith.select %244, %246, %248 : vector<4x64xi1>, vector<4x64xf32>
    %250 = arith.mulf %231, %207 : vector<4x64xf32>
    %251 = arith.mulf %240, %222 : vector<4x64xf32>
    %252 = arith.addf %250, %251 : vector<4x64xf32>
    %253 = math.tanh %252 : vector<4x64xf32>
    %254 = arith.mulf %249, %253 : vector<4x64xf32>
    %c20_29 = arith.constant 20 : index
    %c0_30 = arith.constant 0 : index
    %255 = vector.load %arg3[%c20_29, %c0_30] : memref<32x64xf32, #tpu.memory_space<vmem>>, vector<4x64xf32>
    tpu.vector_store %arg3[%c20_29, %c0_30], %254 {strides = array<i32>} : memref<32x64xf32, #tpu.memory_space<vmem>>, vector<4x64xf32>,
    %c8_31 = arith.constant 8 : index
    %c0_32 = arith.constant 0 : index
    %256 = vector.load %arg4[%c8_31, %c0_32] : memref<32x64xf32, #tpu.memory_space<vmem>>, vector<4x64xf32>
    tpu.vector_store %arg4[%c8_31, %c0_32], %254 {strides = array<i32>} : memref<32x64xf32, #tpu.memory_space<vmem>>, vector<4x64xf32>,
    %257 = arith.truncf %254 : vector<4x64xf32> to vector<4x64xbf16>
    %cst_33 = arith.constant dense<0.000000e+00> : vector<4x128xf32>
    %258 = tpu.matmul %257, %1, %cst_33 {dimension_numbers = #tpu.dot_dimension_numbers<[1], [0], [0], [1], [0, 0, 1, 1], [], []>} : vector<4x64xbf16>, vector<64x128xbf16>, vector<4x128xf32> -> vector<4x128xf32>
    %259 = vector.extract_strided_slice %26 {offsets = [20, 0], sizes = [4, 128], strides = [1, 1]} : vector<32x128xf32> to vector<4x128xf32>
    %260 = arith.addf %258, %259 : vector<4x128xf32>
    %261 = arith.negf %260 : vector<4x128xf32>
    %262 = math.exp %261 : vector<4x128xf32>
    %cst_34 = arith.constant 1.000000e+00 : f32
    %263 = vector.broadcast %cst_34 : f32 to vector<4x128xf32>
    %264 = arith.addf %263, %262 : vector<4x128xf32>
    %265 = arith.divf %263, %264 : vector<4x128xf32>
    %266 = vector.extract_strided_slice %260 {offsets = [0, 0], sizes = [4, 64], strides = [1, 1]} : vector<4x128xf32> to vector<4x64xf32>
    %267 = math.tanh %266 : vector<4x64xf32>
    %268 = vector.extract_strided_slice %265 {offsets = [0, 64], sizes = [4, 1], strides = [1, 1]} : vector<4x128xf32> to vector<4x1xf32>
    %269 = vector.extract_strided_slice %265 {offsets = [0, 67], sizes = [4, 1], strides = [1, 1]} : vector<4x128xf32> to vector<4x1xf32>
    %270 = vector.shape_cast %29 : vector<1x64xi1> to vector<1x64xi1>
    %271 = vector.broadcast %270 : vector<1x64xi1> to vector<4x64xi1>
    %272 = vector.shape_cast %268 : vector<4x1xf32> to vector<4x1xf32>
    %273 = vector.broadcast %272 : vector<4x1xf32> to vector<4x64xf32>
    %274 = vector.shape_cast %269 : vector<4x1xf32> to vector<4x1xf32>
    %275 = vector.broadcast %274 : vector<4x1xf32> to vector<4x64xf32>
    %276 = arith.select %271, %273, %275 : vector<4x64xi1>, vector<4x64xf32>
    %277 = vector.extract_strided_slice %265 {offsets = [0, 65], sizes = [4, 1], strides = [1, 1]} : vector<4x128xf32> to vector<4x1xf32>
    %278 = vector.extract_strided_slice %265 {offsets = [0, 68], sizes = [4, 1], strides = [1, 1]} : vector<4x128xf32> to vector<4x1xf32>
    %279 = vector.shape_cast %29 : vector<1x64xi1> to vector<1x64xi1>
    %280 = vector.broadcast %279 : vector<1x64xi1> to vector<4x64xi1>
    %281 = vector.shape_cast %277 : vector<4x1xf32> to vector<4x1xf32>
    %282 = vector.broadcast %281 : vector<4x1xf32> to vector<4x64xf32>
    %283 = vector.shape_cast %278 : vector<4x1xf32> to vector<4x1xf32>
    %284 = vector.broadcast %283 : vector<4x1xf32> to vector<4x64xf32>
    %285 = arith.select %280, %282, %284 : vector<4x64xi1>, vector<4x64xf32>
    %286 = vector.extract_strided_slice %265 {offsets = [0, 66], sizes = [4, 1], strides = [1, 1]} : vector<4x128xf32> to vector<4x1xf32>
    %287 = vector.extract_strided_slice %265 {offsets = [0, 69], sizes = [4, 1], strides = [1, 1]} : vector<4x128xf32> to vector<4x1xf32>
    %288 = vector.shape_cast %29 : vector<1x64xi1> to vector<1x64xi1>
    %289 = vector.broadcast %288 : vector<1x64xi1> to vector<4x64xi1>
    %290 = vector.shape_cast %286 : vector<4x1xf32> to vector<4x1xf32>
    %291 = vector.broadcast %290 : vector<4x1xf32> to vector<4x64xf32>
    %292 = vector.shape_cast %287 : vector<4x1xf32> to vector<4x1xf32>
    %293 = vector.broadcast %292 : vector<4x1xf32> to vector<4x64xf32>
    %294 = arith.select %289, %291, %293 : vector<4x64xi1>, vector<4x64xf32>
    %295 = arith.mulf %276, %252 : vector<4x64xf32>
    %296 = arith.mulf %285, %267 : vector<4x64xf32>
    %297 = arith.addf %295, %296 : vector<4x64xf32>
    %298 = math.tanh %297 : vector<4x64xf32>
    %299 = arith.mulf %294, %298 : vector<4x64xf32>
    %c24_35 = arith.constant 24 : index
    %c0_36 = arith.constant 0 : index
    %300 = vector.load %arg3[%c24_35, %c0_36] : memref<32x64xf32, #tpu.memory_space<vmem>>, vector<4x64xf32>
    tpu.vector_store %arg3[%c24_35, %c0_36], %299 {strides = array<i32>} : memref<32x64xf32, #tpu.memory_space<vmem>>, vector<4x64xf32>,
    %c4_37 = arith.constant 4 : index
    %c0_38 = arith.constant 0 : index
    %301 = vector.load %arg4[%c4_37, %c0_38] : memref<32x64xf32, #tpu.memory_space<vmem>>, vector<4x64xf32>
    tpu.vector_store %arg4[%c4_37, %c0_38], %299 {strides = array<i32>} : memref<32x64xf32, #tpu.memory_space<vmem>>, vector<4x64xf32>,
    %302 = arith.truncf %299 : vector<4x64xf32> to vector<4x64xbf16>
    %cst_39 = arith.constant dense<0.000000e+00> : vector<4x128xf32>
    %303 = tpu.matmul %302, %1, %cst_39 {dimension_numbers = #tpu.dot_dimension_numbers<[1], [0], [0], [1], [0, 0, 1, 1], [], []>} : vector<4x64xbf16>, vector<64x128xbf16>, vector<4x128xf32> -> vector<4x128xf32>
    %304 = vector.extract_strided_slice %26 {offsets = [24, 0], sizes = [4, 128], strides = [1, 1]} : vector<32x128xf32> to vector<4x128xf32>
    %305 = arith.addf %303, %304 : vector<4x128xf32>
    %306 = arith.negf %305 : vector<4x128xf32>
    %307 = math.exp %306 : vector<4x128xf32>
    %cst_40 = arith.constant 1.000000e+00 : f32
    %308 = vector.broadcast %cst_40 : f32 to vector<4x128xf32>
    %309 = arith.addf %308, %307 : vector<4x128xf32>
    %310 = arith.divf %308, %309 : vector<4x128xf32>
    %311 = vector.extract_strided_slice %305 {offsets = [0, 0], sizes = [4, 64], strides = [1, 1]} : vector<4x128xf32> to vector<4x64xf32>
    %312 = math.tanh %311 : vector<4x64xf32>
    %313 = vector.extract_strided_slice %310 {offsets = [0, 64], sizes = [4, 1], strides = [1, 1]} : vector<4x128xf32> to vector<4x1xf32>
    %314 = vector.extract_strided_slice %310 {offsets = [0, 67], sizes = [4, 1], strides = [1, 1]} : vector<4x128xf32> to vector<4x1xf32>
    %315 = vector.shape_cast %29 : vector<1x64xi1> to vector<1x64xi1>
    %316 = vector.broadcast %315 : vector<1x64xi1> to vector<4x64xi1>
    %317 = vector.shape_cast %313 : vector<4x1xf32> to vector<4x1xf32>
    %318 = vector.broadcast %317 : vector<4x1xf32> to vector<4x64xf32>
    %319 = vector.shape_cast %314 : vector<4x1xf32> to vector<4x1xf32>
    %320 = vector.broadcast %319 : vector<4x1xf32> to vector<4x64xf32>
    %321 = arith.select %316, %318, %320 : vector<4x64xi1>, vector<4x64xf32>
    %322 = vector.extract_strided_slice %310 {offsets = [0, 65], sizes = [4, 1], strides = [1, 1]} : vector<4x128xf32> to vector<4x1xf32>
    %323 = vector.extract_strided_slice %310 {offsets = [0, 68], sizes = [4, 1], strides = [1, 1]} : vector<4x128xf32> to vector<4x1xf32>
    %324 = vector.shape_cast %29 : vector<1x64xi1> to vector<1x64xi1>
    %325 = vector.broadcast %324 : vector<1x64xi1> to vector<4x64xi1>
    %326 = vector.shape_cast %322 : vector<4x1xf32> to vector<4x1xf32>
    %327 = vector.broadcast %326 : vector<4x1xf32> to vector<4x64xf32>
    %328 = vector.shape_cast %323 : vector<4x1xf32> to vector<4x1xf32>
    %329 = vector.broadcast %328 : vector<4x1xf32> to vector<4x64xf32>
    %330 = arith.select %325, %327, %329 : vector<4x64xi1>, vector<4x64xf32>
    %331 = vector.extract_strided_slice %310 {offsets = [0, 66], sizes = [4, 1], strides = [1, 1]} : vector<4x128xf32> to vector<4x1xf32>
    %332 = vector.extract_strided_slice %310 {offsets = [0, 69], sizes = [4, 1], strides = [1, 1]} : vector<4x128xf32> to vector<4x1xf32>
    %333 = vector.shape_cast %29 : vector<1x64xi1> to vector<1x64xi1>
    %334 = vector.broadcast %333 : vector<1x64xi1> to vector<4x64xi1>
    %335 = vector.shape_cast %331 : vector<4x1xf32> to vector<4x1xf32>
    %336 = vector.broadcast %335 : vector<4x1xf32> to vector<4x64xf32>
    %337 = vector.shape_cast %332 : vector<4x1xf32> to vector<4x1xf32>
    %338 = vector.broadcast %337 : vector<4x1xf32> to vector<4x64xf32>
    %339 = arith.select %334, %336, %338 : vector<4x64xi1>, vector<4x64xf32>
    %340 = arith.mulf %321, %297 : vector<4x64xf32>
    %341 = arith.mulf %330, %312 : vector<4x64xf32>
    %342 = arith.addf %340, %341 : vector<4x64xf32>
    %343 = math.tanh %342 : vector<4x64xf32>
    %344 = arith.mulf %339, %343 : vector<4x64xf32>
    %c28_41 = arith.constant 28 : index
    %c0_42 = arith.constant 0 : index
    %345 = vector.load %arg3[%c28_41, %c0_42] : memref<32x64xf32, #tpu.memory_space<vmem>>, vector<4x64xf32>
    tpu.vector_store %arg3[%c28_41, %c0_42], %344 {strides = array<i32>} : memref<32x64xf32, #tpu.memory_space<vmem>>, vector<4x64xf32>,
    %c0_43 = arith.constant 0 : index
    %c0_44 = arith.constant 0 : index
    %346 = vector.load %arg4[%c0_43, %c0_44] : memref<32x64xf32, #tpu.memory_space<vmem>>, vector<4x64xf32>
    tpu.vector_store %arg4[%c0_43, %c0_44], %344 {strides = array<i32>} : memref<32x64xf32, #tpu.memory_space<vmem>>, vector<4x64xf32>,
    %c176 = arith.constant 176 : index
    %c0_45 = arith.constant 0 : index
    %347 = vector.load %arg1[%c176, %c0_45] : memref<248x128xf32, #tpu.memory_space<vmem>>, vector<64x128xf32>
    %348 = vector.extract_strided_slice %2 {offsets = [0, 0], sizes = [1, 50], strides = [1, 1]} : vector<8x128xf32> to vector<1x50xf32>
    %c0_46 = arith.constant 0 : index
    %c0_47 = arith.constant 0 : index
    %349 = vector.load %arg3[%c0_46, %c0_47] : memref<32x64xf32, #tpu.memory_space<vmem>>, vector<32x64xf32>
    %c0_48 = arith.constant 0 : index
    %c0_49 = arith.constant 0 : index
    %350 = vector.load %arg4[%c0_48, %c0_49] : memref<32x64xf32, #tpu.memory_space<vmem>>, vector<32x64xf32>
    %351 = vector.shape_cast %29 : vector<1x64xi1> to vector<1x64xi1>
    %352 = vector.broadcast %351 : vector<1x64xi1> to vector<32x64xi1>
    %353 = arith.select %352, %349, %350 : vector<32x64xi1>, vector<32x64xf32>
    %cst_50 = arith.constant dense<0.000000e+00> : vector<32x128xf32>
    %354 = tpu.matmul %353, %347, %cst_50 {dimension_numbers = #tpu.dot_dimension_numbers<[1], [0], [0], [1], [0, 0, 1, 1], [], []>} : vector<32x64xf32>, vector<64x128xf32>, vector<32x128xf32> -> vector<32x128xf32>
    %355 = vector.extract_strided_slice %354 {offsets = [0, 0], sizes = [32, 50], strides = [1, 1]} : vector<32x128xf32> to vector<32x50xf32>
    %356 = vector.broadcast %348 : vector<1x50xf32> to vector<32x50xf32>
    %357 = arith.addf %355, %356 : vector<32x50xf32>
    %cst_51 = arith.constant dense<0xFF800000> : vector<32xf32>
    %358 = vector.multi_reduction <maximumf>, %357, %cst_51 [1] : vector<32x50xf32> to vector<32xf32>
    %359 = vector.shape_cast %358 : vector<32xf32> to vector<32x1xf32>
    %360 = vector.broadcast %359 : vector<32x1xf32> to vector<32x50xf32>
    %361 = arith.subf %357, %360 : vector<32x50xf32>
    %362 = math.exp %361 : vector<32x50xf32>
    %cst_52 = arith.constant dense<0.000000e+00> : vector<32xf32>
    %363 = vector.multi_reduction <add>, %362, %cst_52 [1] : vector<32x50xf32> to vector<32xf32>
    %364 = vector.shape_cast %363 : vector<32xf32> to vector<32x1xf32>
    %365 = math.log %364 : vector<32x1xf32>
    %366 = vector.broadcast %365 : vector<32x1xf32> to vector<32x50xf32>
    %367 = arith.subf %361, %366 : vector<32x50xf32>
    %c0_53 = arith.constant 0 : index
    %c0_54 = arith.constant 0 : index
    %368 = vector.load %arg2[%c0_53, %c0_54] : memref<32x50xf32, #tpu.memory_space<vmem>>, vector<32x50xf32>
    tpu.vector_store %arg2[%c0_53, %c0_54], %367 {strides = array<i32>} : memref<32x50xf32, #tpu.memory_space<vmem>>, vector<32x50xf32>,
    return
  }
}

</mosaic_0001>

<llo_original>
// kernel: lstm_forward.1
$region0: #{lstm_forward.1}
  #allocation0 [shape = 'u32[]', space=smem, size = 0x4, offset = 0x4, fixed_abs, tag = 'smem constant byte address 0x4 - core index']
  #allocation1 [shape = 'u32[72,128]{1,0:T(1,128)}', space=vmem, size = 0x9000, scoped, tag = 'internal scratch']
  #allocation2 [shape = 'f32[32,64]{1,0:T(8,128)}', space=vmem, size = 0x4000, scoped, tag = 'scratch operand']
  #allocation3 [shape = 'f32[32,64]{1,0:T(8,128)}', space=vmem, size = 0x4000, scoped, tag = 'scratch operand']
  %s0 = inlined_call_operand.vmem [shape: s32[32,2], index: 0, kind: input, shape index: {}]
  %s1 = inlined_call_operand.hbm [shape: f32[248,128], index: 1, kind: input, shape index: {}]
  %s2 = inlined_call_operand.hbm [shape: f32[32,50], index: 2, kind: output, shape index: {}]
  %s3 = sld [smem:[#allocation0]]
  $region22: #{lstm_forward.1} parent=0
    _
  %s5 = ssub.s32 1, %s3
  %s6 = scalar_select 0, %s5, %s3
  $region1: #{lstm_forward.1} parent=0
    #allocation4 [shape = 'u8[126976]{0}', space=vmem, size = 0x1f000, scoped, tag = 'input window, operand 1, single buffered']
    #allocation5 [shape = 's32[1]{0}', space=sflag, size = 0x4, scoped, tag = 'scoped memory for lstm_forward.1']
    #allocation6 [shape = 's32[1]{0}', space=sflag, size = 0x4, scoped, tag = 'scoped memory for lstm_forward.1']
    #allocation7 [shape = 'u8[16384]{0}', space=vmem, size = 0x4000, scoped, tag = 'output window, operand 0, single buffered']
    %7 = vsyncpa [#allocation5], 0
    %8 = vsyncpa [#allocation6], 0
    // Predicated region
    $region2: #{lstm_forward.1} parent=1 // pred_check
      _
    $region3: #{lstm_forward.1} parent=1 // pred_check_branch
      %10 = sbr.rel (0) target = $region5
    $region4: #{lstm_forward.1} parent=1 // pred_region
      _
    $region5: #{lstm_forward.1} parent=1 // pred_fallthru
      _
    // Predicated region
    $region6: #{lstm_forward.1} parent=1 // pred_check
      _
    $region7: #{lstm_forward.1} parent=1 // pred_check_branch
      %12 = sbr.rel (0) target = $region9
    $region8: #{lstm_forward.1} parent=1 // pred_region
      %14 = vsyncadd [#allocation5], 0
      %s15 = sshll.u32 %s1, 4
      %s16 = int_to_ptr.hbm [resolvable:$true] %s15
      %s17 = sshll.u32 [#allocation4], 4
      %s18 = int_to_ptr.vmem [resolvable:$true] %s17
      %23 = dma.hbm_to_vmem [thread:$0]  %s16, 3968, %s18, [#allocation5], 128, 128, 8
    $region9: #{lstm_forward.1} parent=1 // pred_fallthru
      _
    // Predicated region
    $region10: #{lstm_forward.1} parent=1 // pred_check
      _
    $region11: #{lstm_forward.1} parent=1 // pred_check_branch
      %25 = sbr.rel (0) target = $region13
    $region12: #{lstm_forward.1} parent=1 // pred_region
      %27 = dma.done [#allocation5], 3968
    $region13: #{lstm_forward.1} parent=1 // pred_fallthru
      _
    %v29 = vld [vmem:[#allocation4 + $0x70] sm:$0xff]
    %v30 = vld [vmem:[#allocation4 + $0x78] sm:$0xff]
    %v31 = vld [vmem:[#allocation4 + $0x80] sm:$0xff]
    %v32 = vld [vmem:[#allocation4 + $0x88] sm:$0xff]
    %v33 = vld [vmem:[#allocation4 + $0x90] sm:$0xff]
    %v34 = vld [vmem:[#allocation4 + $0x98] sm:$0xff]
    %v35 = vld [vmem:[#allocation4 + $0xa0] sm:$0xff]
    %v36 = vld [vmem:[#allocation4 + $0xa8] sm:$0xff]
    %v37 = vpack.c.bf16 %v30, %v29
    %v38 = vpack.c.bf16 %v32, %v31
    %v39 = vpack.c.bf16 %v34, %v33
    %v40 = vpack.c.bf16 %v36, %v35
    %v41 = vld [vmem:[#allocation4 + $0xf0] sm:$0xff]
    %v42 = vperm.slane %v41, 1
    %v43 = vperm.slane %v41, 2
    %v44 = vld [vmem:[%s0] sm:$0xff]
    %v45 = vld [vmem:[%s0 + $0x8] sm:$0xff]
    %v46 = vld [vmem:[%s0 + $0x10] sm:$0xff]
    %v47 = vld [vmem:[%s0 + $0x18] sm:$0xff]
    %v48 = vld [vmem:[#allocation4] sm:$0xff]
    %v49 = vld [vmem:[#allocation4 + $0x8] sm:$0xff]
    %v50 = vld [vmem:[#allocation4 + $0x10] sm:$0xff]
    %v51 = vld [vmem:[#allocation4 + $0x18] sm:$0xff]
    %v52 = vld [vmem:[#allocation4 + $0x20] sm:$0xff]
    %v53 = vld [vmem:[#allocation4 + $0x28] sm:$0xff]
    %v54 = vld [vmem:[#allocation4 + $0x30] sm:$0xff]
    %v55 = vld [vmem:[#allocation4 + $0x38] sm:$0xff]
    %v56 = vld [vmem:[#allocation4 + $0x40] sm:$0xff]
    %v57 = vld [vmem:[#allocation4 + $0x48] sm:$0xff]
    %v58 = vld [vmem:[#allocation4 + $0x50] sm:$0xff]
    %v59 = vld [vmem:[#allocation4 + $0x58] sm:$0xff]
    %v60 = vld [vmem:[#allocation4 + $0x60] sm:$0xff]
    %v61 = vld [vmem:[#allocation4 + $0x68] sm:$0xff]
    %v62 = vlaneseq
    %v63 = vand.u32 %v62, 127
    %vm64 = vcmp.lt.s32.totalorder %v63, 56
    %v65 = vadd.s32 %v44, 56
    %v66 = vadd.s32 %v45, 56
    %v67 = vadd.s32 %v46, 56
    %v68 = vadd.s32 %v47, 56
    %69 = vset.pattern.permute.xlu0 0
    %70 = vperm.xlu0 %69, %v44
    %v71 = vpop.permute.xlu0 %70
    %72 = vset.pattern.permute.xlu0 0
    %73 = vperm.xlu0 %72, %v45
    %v74 = vpop.permute.xlu0 %73
    %75 = vset.pattern.permute.xlu0 0
    %76 = vperm.xlu0 %75, %v46
    %v77 = vpop.permute.xlu0 %76
    %78 = vset.pattern.permute.xlu0 0
    %79 = vperm.xlu0 %78, %v47
    %v80 = vpop.permute.xlu0 %79
    %81 = vset.pattern.permute.xlu0 1
    %82 = vperm.xlu0 %81, %v65
    %v83 = vpop.permute.xlu0 %82
    %84 = vset.pattern.permute.xlu0 1
    %85 = vperm.xlu0 %84, %v66
    %v86 = vpop.permute.xlu0 %85
    %87 = vset.pattern.permute.xlu0 1
    %88 = vperm.xlu0 %87, %v67
    %v89 = vpop.permute.xlu0 %88
    %90 = vset.pattern.permute.xlu0 1
    %91 = vperm.xlu0 %90, %v68
    %v92 = vpop.permute.xlu0 %91
    %v93 = vsel %vm64, %v71, %v83
    %v94 = vsel %vm64, %v74, %v86
    %v95 = vsel %vm64, %v77, %v89
    %v96 = vsel %vm64, %v80, %v92
    %vm97 = vcmp.eq.s32.totalorder %v63, %v93
    %vm98 = vcmp.eq.s32.totalorder %v63, %v94
    %vm99 = vcmp.eq.s32.totalorder %v63, %v95
    %vm100 = vcmp.eq.s32.totalorder %v63, %v96
    %v101 = vsel %vm97, 1, 0
    %v102 = vsel %vm98, 1, 0
    %v103 = vsel %vm99, 1, 0
    %v104 = vsel %vm100, 1, 0
    %v105 = vcvt.s32.f32 %v101
    %v106 = vcvt.s32.f32 %v102
    %v107 = vcvt.s32.f32 %v103
    %v108 = vcvt.s32.f32 %v104
    %vm109 = vcmask 916480
    %v111 = vsel %vm109, %v105, 0
    %v114 = vsel %vm109, %v106, 0
    %v117 = vsel %vm109, %v107, 0
    %v120 = vsel %vm109, %v108, 0
    %122 = vmatpush.msra.mxu0 0.0
    %123 = vmatpush.msra.mxu0 0.0
    %124 = vmatpush.msra.mxu0 %v61
    %125 = vmatpush.msra.mxu0 %v60
    %126 = vmatpush.msra.mxu0 %v59
    %127 = vmatpush.msra.mxu0 %v58
    %128 = vmatpush.msra.mxu0 %v57
    %129 = vmatpush.msra.mxu0 %v56
    %130 = vmatpush.msra.mxu0 %v55
    %131 = vmatpush.msra.mxu0 %v54
    %132 = vmatpush.msra.mxu0 %v53
    %133 = vmatpush.msra.mxu0 %v52
    %134 = vmatpush.msra.mxu0 %v51
    %135 = vmatpush.msra.mxu0 %v50
    %136 = vmatpush.msra.mxu0 %v49
    %137 = vmatpush.msra.mxu0 %v48
    %138 = vmatmul.f32.gmra.mxu0 %v111
    %v139 = vpop.f32.mrf.mxu0
    %v140 = vadd.f32 0.0, %v139
    %141 = vmatmul.f32.gmra.mxu0 %v114
    %v142 = vpop.f32.mrf.mxu0
    %v143 = vadd.f32 0.0, %v142
    %144 = vmatmul.f32.gmra.mxu0 %v117
    %v145 = vpop.f32.mrf.mxu0
    %v146 = vadd.f32 0.0, %v145
    %147 = vmatmul.f32.gmra.mxu0 %v120
    %v148 = vpop.f32.mrf.mxu0
    %v149 = vadd.f32 0.0, %v148
    %150 = vdwg.mxu0
    %vm151 = vcmp.lt.s32.totalorder %v63, 32
    %vm152 = vcmask 519168
    %153 = vst.msk [vmem:[#allocation2] sm:$0xf] %vm152, %v42
    %154 = vst.msk [vmem:[#allocation3 + $0x1c] sm:$0xf] %vm152, %v42
    %v155 = vpack.c.bf16 %v42, %v42
    %vm156 = vcmask 523264
    %v158 = vsel %vm156, %v155, 0
    %160 = vmatpush.bf16.msra.mxu0 0
    %161 = vmatpush.bf16.msra.mxu0 0
    %162 = vmatpush.bf16.msra.mxu0 0
    %163 = vmatpush.bf16.msra.mxu0 0
    %164 = vmatpush.bf16.msra.mxu0 %v40
    %165 = vmatpush.bf16.msra.mxu0 %v39
    %166 = vmatpush.bf16.msra.mxu0 %v38
    %167 = vmatpush.bf16.msra.mxu0 %v37
    %168 = vmatmul.bf16.gmra.mxu0 %v158
    %v169 = vpop.f32.mrf.mxu0
    %v170 = vadd.f32 %v140, %v169
    %v171 = vpop.f32.mrf.mxu0
    %172 = vdwg.mxu0
    %v173 = vxor.u32 %v170, 2147483648
    %v174 = vmul.f32 %v173, 1.442695
    %v175 = vpow.pop %v174
    %v176 = vadd.f32 %v175, 1.0
    %v177 = vrcp.pop %v176
    %v178 = vmul.f32 %v176, %v177
    %v179 = vsub.f32 1.0, %v178
    %v180 = vmul.f32 %v177, %v179
    %v181 = vadd.f32 %v177, %v180
    %vm182 = vweird.f32 %v176
    %vm183 = vweird.f32 %v177
    %vm184 = vmor %vm182, %vm183
    %v185 = vsel %vm184, %v177, %v181
    %v186 = vand.u32 2147483647, %v176
    %vm187 = vcmp.eq.f32.partialorder %v186, 8.507059e+37
    %v188 = vand.u32 %v176, 2147483648
    %v189 = vor.u32 1.1754944e-38, %v188
    %v190 = vsel %vm187, %v189, %v185
    %v191 = vmul.f32 1.0, %v190
    %v192 = vtanh.pop %v170
    %v193 = vsel %vm151, 1, 0
    %vm194 = vcmp.eq.s32.totalorder %v193, 1
    %196 = vset.pattern.permute.xlu0 64
    %197 = vperm.xlu0 %196, %v191
    %v198 = vpop.permute.xlu0 %197
    %200 = vset.pattern.permute.xlu0 67
    %201 = vperm.xlu0 %200, %v191
    %v202 = vpop.permute.xlu0 %201
    %v204 = vsel %vm194, %v198, %v202
    %205 = vset.pattern.permute.xlu0 65
    %206 = vperm.xlu0 %205, %v191
    %v207 = vpop.permute.xlu0 %206
    %209 = vset.pattern.permute.xlu0 68
    %210 = vperm.xlu0 %209, %v191
    %v211 = vpop.permute.xlu0 %210
    %v213 = vsel %vm194, %v207, %v211
    %214 = vset.pattern.permute.xlu0 66
    %215 = vperm.xlu0 %214, %v191
    %v216 = vpop.permute.xlu0 %215
    %218 = vset.pattern.permute.xlu0 69
    %219 = vperm.xlu0 %218, %v191
    %v220 = vpop.permute.xlu0 %219
    %v222 = vsel %vm194, %v216, %v220
    %v223 = vmul.f32 %v204, %v43
    %v224 = vmul.f32 %v213, %v192
    %v225 = vadd.f32 %v223, %v224
    %v226 = vtanh.pop %v225
    %v227 = vmul.f32 %v222, %v226
    %228 = vst.msk [vmem:[#allocation2 + $0x4] sm:$0xf] %vm152, %v227
    %229 = vst.msk [vmem:[#allocation3 + $0x18] sm:$0xf] %vm152, %v227
    %v230 = vpack.c.bf16 %v227, %v227
    %v232 = vrot.slane %v140, 4
    %v235 = vsel %vm156, %v230, 0
    %237 = vmatpush.bf16.msra.mxu0 0
    %238 = vmatpush.bf16.msra.mxu0 0
    %239 = vmatpush.bf16.msra.mxu0 0
    %240 = vmatpush.bf16.msra.mxu0 0
    %241 = vmatpush.bf16.msra.mxu0 %v40
    %242 = vmatpush.bf16.msra.mxu0 %v39
    %243 = vmatpush.bf16.msra.mxu0 %v38
    %244 = vmatpush.bf16.msra.mxu0 %v37
    %245 = vmatmul.bf16.gmra.mxu0 %v235
    %v246 = vpop.f32.mrf.mxu0
    %v247 = vadd.f32 %v232, %v246
    %v248 = vpop.f32.mrf.mxu0
    %249 = vdwg.mxu0
    %v250 = vxor.u32 %v247, 2147483648
    %v251 = vmul.f32 %v250, 1.442695
    %v252 = vpow.pop %v251
    %v253 = vadd.f32 %v252, 1.0
    %v254 = vrcp.pop %v253
    %v255 = vmul.f32 %v253, %v254
    %v256 = vsub.f32 1.0, %v255
    %v257 = vmul.f32 %v254, %v256
    %v258 = vadd.f32 %v254, %v257
    %vm259 = vweird.f32 %v253
    %vm260 = vweird.f32 %v254
    %vm261 = vmor %vm259, %vm260
    %v262 = vsel %vm261, %v254, %v258
    %v263 = vand.u32 2147483647, %v253
    %vm264 = vcmp.eq.f32.partialorder %v263, 8.507059e+37
    %v265 = vand.u32 %v253, 2147483648
    %v266 = vor.u32 1.1754944e-38, %v265
    %v267 = vsel %vm264, %v266, %v262
    %v268 = vmul.f32 1.0, %v267
    %v269 = vtanh.pop %v247
    %271 = vset.pattern.permute.xlu0 64
    %272 = vperm.xlu0 %271, %v268
    %v273 = vpop.permute.xlu0 %272
    %275 = vset.pattern.permute.xlu0 67
    %276 = vperm.xlu0 %275, %v268
    %v277 = vpop.permute.xlu0 %276
    %v279 = vsel %vm194, %v273, %v277
    %280 = vset.pattern.permute.xlu0 65
    %281 = vperm.xlu0 %280, %v268
    %v282 = vpop.permute.xlu0 %281
    %284 = vset.pattern.permute.xlu0 68
    %285 = vperm.xlu0 %284, %v268
    %v286 = vpop.permute.xlu0 %285
    %v288 = vsel %vm194, %v282, %v286
    %289 = vset.pattern.permute.xlu0 66
    %290 = vperm.xlu0 %289, %v268
    %v291 = vpop.permute.xlu0 %290
    %293 = vset.pattern.permute.xlu0 69
    %294 = vperm.xlu0 %293, %v268
    %v295 = vpop.permute.xlu0 %294
    %v297 = vsel %vm194, %v291, %v295
    %v298 = vmul.f32 %v279, %v225
    %v299 = vmul.f32 %v288, %v269
    %v300 = vadd.f32 %v298, %v299
    %v301 = vtanh.pop %v300
    %v302 = vmul.f32 %v297, %v301
    %303 = vst.msk [vmem:[#allocation2 + $0x8] sm:$0xf] %vm152, %v302
    %304 = vst.msk [vmem:[#allocation3 + $0x14] sm:$0xf] %vm152, %v302
    %v305 = vpack.c.bf16 %v302, %v302
    %v307 = vsel %vm156, %v305, 0
    %309 = vmatpush.bf16.msra.mxu0 0
    %310 = vmatpush.bf16.msra.mxu0 0
    %311 = vmatpush.bf16.msra.mxu0 0
    %312 = vmatpush.bf16.msra.mxu0 0
    %313 = vmatpush.bf16.msra.mxu0 %v40
    %314 = vmatpush.bf16.msra.mxu0 %v39
    %315 = vmatpush.bf16.msra.mxu0 %v38
    %316 = vmatpush.bf16.msra.mxu0 %v37
    %317 = vmatmul.bf16.gmra.mxu0 %v307
    %v318 = vpop.f32.mrf.mxu0
    %v319 = vadd.f32 %v143, %v318
    %v320 = vpop.f32.mrf.mxu0
    %321 = vdwg.mxu0
    %v322 = vxor.u32 %v319, 2147483648
    %v323 = vmul.f32 %v322, 1.442695
    %v324 = vpow.pop %v323
    %v325 = vadd.f32 %v324, 1.0
    %v326 = vrcp.pop %v325
    %v327 = vmul.f32 %v325, %v326
    %v328 = vsub.f32 1.0, %v327
    %v329 = vmul.f32 %v326, %v328
    %v330 = vadd.f32 %v326, %v329
    %vm331 = vweird.f32 %v325
    %vm332 = vweird.f32 %v326
    %vm333 = vmor %vm331, %vm332
    %v334 = vsel %vm333, %v326, %v330
    %v335 = vand.u32 2147483647, %v325
    %vm336 = vcmp.eq.f32.partialorder %v335, 8.507059e+37
    %v337 = vand.u32 %v325, 2147483648
    %v338 = vor.u32 1.1754944e-38, %v337
    %v339 = vsel %vm336, %v338, %v334
    %v340 = vmul.f32 1.0, %v339
    %v341 = vtanh.pop %v319
    %343 = vset.pattern.permute.xlu0 64
    %344 = vperm.xlu0 %343, %v340
    %v345 = vpop.permute.xlu0 %344
    %347 = vset.pattern.permute.xlu0 67
    %348 = vperm.xlu0 %347, %v340
    %v349 = vpop.permute.xlu0 %348
    %v351 = vsel %vm194, %v345, %v349
    %352 = vset.pattern.permute.xlu0 65
    %353 = vperm.xlu0 %352, %v340
    %v354 = vpop.permute.xlu0 %353
    %356 = vset.pattern.permute.xlu0 68
    %357 = vperm.xlu0 %356, %v340
    %v358 = vpop.permute.xlu0 %357
    %v360 = vsel %vm194, %v354, %v358
    %361 = vset.pattern.permute.xlu0 66
    %362 = vperm.xlu0 %361, %v340
    %v363 = vpop.permute.xlu0 %362
    %365 = vset.pattern.permute.xlu0 69
    %366 = vperm.xlu0 %365, %v340
    %v367 = vpop.permute.xlu0 %366
    %v369 = vsel %vm194, %v363, %v367
    %v370 = vmul.f32 %v351, %v300
    %v371 = vmul.f32 %v360, %v341
    %v372 = vadd.f32 %v370, %v371
    %v373 = vtanh.pop %v372
    %v374 = vmul.f32 %v369, %v373
    %375 = vst.msk [vmem:[#allocation2 + $0xc] sm:$0xf] %vm152, %v374
    %376 = vst.msk [vmem:[#allocation3 + $0x10] sm:$0xf] %vm152, %v374
    %v377 = vpack.c.bf16 %v374, %v374
    %v379 = vrot.slane %v143, 4
    %v382 = vsel %vm156, %v377, 0
    %384 = vmatpush.bf16.msra.mxu0 0
    %385 = vmatpush.bf16.msra.mxu0 0
    %386 = vmatpush.bf16.msra.mxu0 0
    %387 = vmatpush.bf16.msra.mxu0 0
    %388 = vmatpush.bf16.msra.mxu0 %v40
    %389 = vmatpush.bf16.msra.mxu0 %v39
    %390 = vmatpush.bf16.msra.mxu0 %v38
    %391 = vmatpush.bf16.msra.mxu0 %v37
    %392 = vmatmul.bf16.gmra.mxu0 %v382
    %v393 = vpop.f32.mrf.mxu0
    %v394 = vadd.f32 %v379, %v393
    %v395 = vpop.f32.mrf.mxu0
    %396 = vdwg.mxu0
    %v397 = vxor.u32 %v394, 2147483648
    %v398 = vmul.f32 %v397, 1.442695
    %v399 = vpow.pop %v398
    %v400 = vadd.f32 %v399, 1.0
    %v401 = vrcp.pop %v400
    %v402 = vmul.f32 %v400, %v401
    %v403 = vsub.f32 1.0, %v402
    %v404 = vmul.f32 %v401, %v403
    %v405 = vadd.f32 %v401, %v404
    %vm406 = vweird.f32 %v400
    %vm407 = vweird.f32 %v401
    %vm408 = vmor %vm406, %vm407
    %v409 = vsel %vm408, %v401, %v405
    %v410 = vand.u32 2147483647, %v400
    %vm411 = vcmp.eq.f32.partialorder %v410, 8.507059e+37
    %v412 = vand.u32 %v400, 2147483648
    %v413 = vor.u32 1.1754944e-38, %v412
    %v414 = vsel %vm411, %v413, %v409
    %v415 = vmul.f32 1.0, %v414
    %v416 = vtanh.pop %v394
    %418 = vset.pattern.permute.xlu0 64
    %419 = vperm.xlu0 %418, %v415
    %v420 = vpop.permute.xlu0 %419
    %422 = vset.pattern.permute.xlu0 67
    %423 = vperm.xlu0 %422, %v415
    %v424 = vpop.permute.xlu0 %423
    %v426 = vsel %vm194, %v420, %v424
    %427 = vset.pattern.permute.xlu0 65
    %428 = vperm.xlu0 %427, %v415
    %v429 = vpop.permute.xlu0 %428
    %431 = vset.pattern.permute.xlu0 68
    %432 = vperm.xlu0 %431, %v415
    %v433 = vpop.permute.xlu0 %432
    %v435 = vsel %vm194, %v429, %v433
    %436 = vset.pattern.permute.xlu0 66
    %437 = vperm.xlu0 %436, %v415
    %v438 = vpop.permute.xlu0 %437
    %440 = vset.pattern.permute.xlu0 69
    %441 = vperm.xlu0 %440, %v415
    %v442 = vpop.permute.xlu0 %441
    %v444 = vsel %vm194, %v438, %v442
    %v445 = vmul.f32 %v426, %v372
    %v446 = vmul.f32 %v435, %v416
    %v447 = vadd.f32 %v445, %v446
    %v448 = vtanh.pop %v447
    %v449 = vmul.f32 %v444, %v448
    %450 = vst.msk [vmem:[#allocation2 + $0x10] sm:$0xf] %vm152, %v449
    %451 = vst.msk [vmem:[#allocation3 + $0xc] sm:$0xf] %vm152, %v449
    %v452 = vpack.c.bf16 %v449, %v449
    %v454 = vsel %vm156, %v452, 0
    %456 = vmatpush.bf16.msra.mxu0 0
    %457 = vmatpush.bf16.msra.mxu0 0
    %458 = vmatpush.bf16.msra.mxu0 0
    %459 = vmatpush.bf16.msra.mxu0 0
    %460 = vmatpush.bf16.msra.mxu0 %v40
    %461 = vmatpush.bf16.msra.mxu0 %v39
    %462 = vmatpush.bf16.msra.mxu0 %v38
    %463 = vmatpush.bf16.msra.mxu0 %v37
    %464 = vmatmul.bf16.gmra.mxu0 %v454
    %v465 = vpop.f32.mrf.mxu0
    %v466 = vadd.f32 %v146, %v465
    %v467 = vpop.f32.mrf.mxu0
    %468 = vdwg.mxu0
    %v469 = vxor.u32 %v466, 2147483648
    %v470 = vmul.f32 %v469, 1.442695
    %v471 = vpow.pop %v470
    %v472 = vadd.f32 %v471, 1.0
    %v473 = vrcp.pop %v472
    %v474 = vmul.f32 %v472, %v473
    %v475 = vsub.f32 1.0, %v474
    %v476 = vmul.f32 %v473, %v475
    %v477 = vadd.f32 %v473, %v476
    %vm478 = vweird.f32 %v472
    %vm479 = vweird.f32 %v473
    %vm480 = vmor %vm478, %vm479
    %v481 = vsel %vm480, %v473, %v477
    %v482 = vand.u32 2147483647, %v472
    %vm483 = vcmp.eq.f32.partialorder %v482, 8.507059e+37
    %v484 = vand.u32 %v472, 2147483648
    %v485 = vor.u32 1.1754944e-38, %v484
    %v486 = vsel %vm483, %v485, %v481
    %v487 = vmul.f32 1.0, %v486
    %v488 = vtanh.pop %v466
    %490 = vset.pattern.permute.xlu0 64
    %491 = vperm.xlu0 %490, %v487
    %v492 = vpop.permute.xlu0 %491
    %494 = vset.pattern.permute.xlu0 67
    %495 = vperm.xlu0 %494, %v487
    %v496 = vpop.permute.xlu0 %495
    %v498 = vsel %vm194, %v492, %v496
    %499 = vset.pattern.permute.xlu0 65
    %500 = vperm.xlu0 %499, %v487
    %v501 = vpop.permute.xlu0 %500
    %503 = vset.pattern.permute.xlu0 68
    %504 = vperm.xlu0 %503, %v487
    %v505 = vpop.permute.xlu0 %504
    %v507 = vsel %vm194, %v501, %v505
    %508 = vset.pattern.permute.xlu0 66
    %509 = vperm.xlu0 %508, %v487
    %v510 = vpop.permute.xlu0 %509
    %512 = vset.pattern.permute.xlu0 69
    %513 = vperm.xlu0 %512, %v487
    %v514 = vpop.permute.xlu0 %513
    %v516 = vsel %vm194, %v510, %v514
    %v517 = vmul.f32 %v498, %v447
    %v518 = vmul.f32 %v507, %v488
    %v519 = vadd.f32 %v517, %v518
    %v520 = vtanh.pop %v519
    %v521 = vmul.f32 %v516, %v520
    %522 = vst.msk [vmem:[#allocation2 + $0x14] sm:$0xf] %vm152, %v521
    %523 = vst.msk [vmem:[#allocation3 + $0x8] sm:$0xf] %vm152, %v521
    %v524 = vpack.c.bf16 %v521, %v521
    %v526 = vrot.slane %v146, 4
    %v529 = vsel %vm156, %v524, 0
    %531 = vmatpush.bf16.msra.mxu0 0
    %532 = vmatpush.bf16.msra.mxu0 0
    %533 = vmatpush.bf16.msra.mxu0 0
    %534 = vmatpush.bf16.msra.mxu0 0
    %535 = vmatpush.bf16.msra.mxu0 %v40
    %536 = vmatpush.bf16.msra.mxu0 %v39
    %537 = vmatpush.bf16.msra.mxu0 %v38
    %538 = vmatpush.bf16.msra.mxu0 %v37
    %539 = vmatmul.bf16.gmra.mxu0 %v529
    %v540 = vpop.f32.mrf.mxu0
    %v541 = vadd.f32 %v526, %v540
    %v542 = vpop.f32.mrf.mxu0
    %543 = vdwg.mxu0
    %v544 = vxor.u32 %v541, 2147483648
    %v545 = vmul.f32 %v544, 1.442695
    %v546 = vpow.pop %v545
    %v547 = vadd.f32 %v546, 1.0
    %v548 = vrcp.pop %v547
    %v549 = vmul.f32 %v547, %v548
    %v550 = vsub.f32 1.0, %v549
    %v551 = vmul.f32 %v548, %v550
    %v552 = vadd.f32 %v548, %v551
    %vm553 = vweird.f32 %v547
    %vm554 = vweird.f32 %v548
    %vm555 = vmor %vm553, %vm554
    %v556 = vsel %vm555, %v548, %v552
    %v557 = vand.u32 2147483647, %v547
    %vm558 = vcmp.eq.f32.partialorder %v557, 8.507059e+37
    %v559 = vand.u32 %v547, 2147483648
    %v560 = vor.u32 1.1754944e-38, %v559
    %v561 = vsel %vm558, %v560, %v556
    %v562 = vmul.f32 1.0, %v561
    %v563 = vtanh.pop %v541
    %565 = vset.pattern.permute.xlu0 64
    %566 = vperm.xlu0 %565, %v562
    %v567 = vpop.permute.xlu0 %566
    %569 = vset.pattern.permute.xlu0 67
    %570 = vperm.xlu0 %569, %v562
    %v571 = vpop.permute.xlu0 %570
    %v573 = vsel %vm194, %v567, %v571
    %574 = vset.pattern.permute.xlu0 65
    %575 = vperm.xlu0 %574, %v562
    %v576 = vpop.permute.xlu0 %575
    %578 = vset.pattern.permute.xlu0 68
    %579 = vperm.xlu0 %578, %v562
    %v580 = vpop.permute.xlu0 %579
    %v582 = vsel %vm194, %v576, %v580
    %583 = vset.pattern.permute.xlu0 66
    %584 = vperm.xlu0 %583, %v562
    %v585 = vpop.permute.xlu0 %584
    %587 = vset.pattern.permute.xlu0 69
    %588 = vperm.xlu0 %587, %v562
    %v589 = vpop.permute.xlu0 %588
    %v591 = vsel %vm194, %v585, %v589
    %v592 = vmul.f32 %v573, %v519
    %v593 = vmul.f32 %v582, %v563
    %v594 = vadd.f32 %v592, %v593
    %v595 = vtanh.pop %v594
    %v596 = vmul.f32 %v591, %v595
    %597 = vst.msk [vmem:[#allocation2 + $0x18] sm:$0xf] %vm152, %v596
    %598 = vst.msk [vmem:[#allocation3 + $0x4] sm:$0xf] %vm152, %v596
    %v599 = vpack.c.bf16 %v596, %v596
    %v601 = vsel %vm156, %v599, 0
    %603 = vmatpush.bf16.msra.mxu0 0
    %604 = vmatpush.bf16.msra.mxu0 0
    %605 = vmatpush.bf16.msra.mxu0 0
    %606 = vmatpush.bf16.msra.mxu0 0
    %607 = vmatpush.bf16.msra.mxu0 %v40
    %608 = vmatpush.bf16.msra.mxu0 %v39
    %609 = vmatpush.bf16.msra.mxu0 %v38
    %610 = vmatpush.bf16.msra.mxu0 %v37
    %611 = vmatmul.bf16.gmra.mxu0 %v601
    %v612 = vpop.f32.mrf.mxu0
    %v613 = vadd.f32 %v149, %v612
    %v614 = vpop.f32.mrf.mxu0
    %615 = vdwg.mxu0
    %v616 = vxor.u32 %v613, 2147483648
    %v617 = vmul.f32 %v616, 1.442695
    %v618 = vpow.pop %v617
    %v619 = vadd.f32 %v618, 1.0
    %v620 = vrcp.pop %v619
    %v621 = vmul.f32 %v619, %v620
    %v622 = vsub.f32 1.0, %v621
    %v623 = vmul.f32 %v620, %v622
    %v624 = vadd.f32 %v620, %v623
    %vm625 = vweird.f32 %v619
    %vm626 = vweird.f32 %v620
    %vm627 = vmor %vm625, %vm626
    %v628 = vsel %vm627, %v620, %v624
    %v629 = vand.u32 2147483647, %v619
    %vm630 = vcmp.eq.f32.partialorder %v629, 8.507059e+37
    %v631 = vand.u32 %v619, 2147483648
    %v632 = vor.u32 1.1754944e-38, %v631
    %v633 = vsel %vm630, %v632, %v628
    %v634 = vmul.f32 1.0, %v633
    %v635 = vtanh.pop %v613
    %637 = vset.pattern.permute.xlu0 64
    %638 = vperm.xlu0 %637, %v634
    %v639 = vpop.permute.xlu0 %638
    %641 = vset.pattern.permute.xlu0 67
    %642 = vperm.xlu0 %641, %v634
    %v643 = vpop.permute.xlu0 %642
    %v645 = vsel %vm194, %v639, %v643
    %646 = vset.pattern.permute.xlu0 65
    %647 = vperm.xlu0 %646, %v634
    %v648 = vpop.permute.xlu0 %647
    %650 = vset.pattern.permute.xlu0 68
    %651 = vperm.xlu0 %650, %v634
    %v652 = vpop.permute.xlu0 %651
    %v654 = vsel %vm194, %v648, %v652
    %655 = vset.pattern.permute.xlu0 66
    %656 = vperm.xlu0 %655, %v634
    %v657 = vpop.permute.xlu0 %656
    %659 = vset.pattern.permute.xlu0 69
    %660 = vperm.xlu0 %659, %v634
    %v661 = vpop.permute.xlu0 %660
    %v663 = vsel %vm194, %v657, %v661
    %v664 = vmul.f32 %v645, %v594
    %v665 = vmul.f32 %v654, %v635
    %v666 = vadd.f32 %v664, %v665
    %v667 = vtanh.pop %v666
    %v668 = vmul.f32 %v663, %v667
    %669 = vst.msk [vmem:[#allocation2 + $0x1c] sm:$0xf] %vm152, %v668
    %670 = vst.msk [vmem:[#allocation3] sm:$0xf] %vm152, %v668
    %v671 = vld [vmem:[#allocation4 + $0xb0] sm:$0xff]
    %v672 = vld [vmem:[#allocation4 + $0xb8] sm:$0xff]
    %v673 = vld [vmem:[#allocation4 + $0xc0] sm:$0xff]
    %v674 = vld [vmem:[#allocation4 + $0xc8] sm:$0xff]
    %v675 = vld [vmem:[#allocation4 + $0xd0] sm:$0xff]
    %v676 = vld [vmem:[#allocation4 + $0xd8] sm:$0xff]
    %v677 = vld [vmem:[#allocation4 + $0xe0] sm:$0xff]
    %v678 = vld [vmem:[#allocation4 + $0xe8] sm:$0xff]
    %v679 = vld [vmem:[#allocation2] sm:$0xff]
    %v680 = vld [vmem:[#allocation2 + $0x8] sm:$0xff]
    %v681 = vld [vmem:[#allocation2 + $0x10] sm:$0xff]
    %v682 = vld [vmem:[#allocation2 + $0x18] sm:$0xff]
    %v683 = vld [vmem:[#allocation3] sm:$0xff]
    %v684 = vld [vmem:[#allocation3 + $0x8] sm:$0xff]
    %v685 = vld [vmem:[#allocation3 + $0x10] sm:$0xff]
    %v686 = vld [vmem:[#allocation3 + $0x18] sm:$0xff]
    %v687 = vsel %vm194, %v679, %v683
    %v688 = vsel %vm194, %v680, %v684
    %v689 = vsel %vm194, %v681, %v685
    %v690 = vsel %vm194, %v682, %v686
    %v692 = vsel %vm156, %v687, 0
    %v695 = vsel %vm156, %v688, 0
    %v698 = vsel %vm156, %v689, 0
    %v701 = vsel %vm156, %v690, 0
    %703 = vmatpush.msra.mxu0 0.0
    %704 = vmatpush.msra.mxu0 0.0
    %705 = vmatpush.msra.mxu0 0.0
    %706 = vmatpush.msra.mxu0 0.0
    %707 = vmatpush.msra.mxu0 0.0
    %708 = vmatpush.msra.mxu0 0.0
    %709 = vmatpush.msra.mxu0 0.0
    %710 = vmatpush.msra.mxu0 0.0
    %711 = vmatpush.msra.mxu0 %v678
    %712 = vmatpush.msra.mxu0 %v677
    %713 = vmatpush.msra.mxu0 %v676
    %714 = vmatpush.msra.mxu0 %v675
    %715 = vmatpush.msra.mxu0 %v674
    %716 = vmatpush.msra.mxu0 %v673
    %717 = vmatpush.msra.mxu0 %v672
    %718 = vmatpush.msra.mxu0 %v671
    %719 = vmatmul.f32.gmra.mxu0 %v692
    %v720 = vpop.f32.mrf.mxu0
    %v721 = vadd.f32 0.0, %v720
    %722 = vmatmul.f32.gmra.mxu0 %v695
    %v723 = vpop.f32.mrf.mxu0
    %v724 = vadd.f32 0.0, %v723
    %725 = vmatmul.f32.gmra.mxu0 %v698
    %v726 = vpop.f32.mrf.mxu0
    %v727 = vadd.f32 0.0, %v726
    %728 = vmatmul.f32.gmra.mxu0 %v701
    %v729 = vpop.f32.mrf.mxu0
    %v730 = vadd.f32 0.0, %v729
    %731 = vdwg.mxu0
    %v732 = vperm.slane %v41, 0
    %v733 = vadd.f32 %v721, %v732
    %v734 = vadd.f32 %v724, %v732
    %v735 = vadd.f32 %v727, %v732
    %v736 = vadd.f32 %v730, %v732
    %vm737 = vcmask 408576
    %v738 = vsel %vm737, %v733, -inf
    %739 = vmax.xlane.f32.xlu0 %v738
    %v740 = vpop.xlane.xlu0 %739
    %v741 = vsel %vm737, %v734, -inf
    %742 = vmax.xlane.f32.xlu0 %v741
    %v743 = vpop.xlane.xlu0 %742
    %v744 = vsel %vm737, %v735, -inf
    %745 = vmax.xlane.f32.xlu0 %v744
    %v746 = vpop.xlane.xlu0 %745
    %v747 = vsel %vm737, %v736, -inf
    %748 = vmax.xlane.f32.xlu0 %v747
    %v749 = vpop.xlane.xlu0 %748
    %v750 = vsub.f32 %v733, %v740
    %v751 = vsub.f32 %v734, %v743
    %v752 = vsub.f32 %v735, %v746
    %v753 = vsub.f32 %v736, %v749
    %v754 = vmul.f32 %v750, 1.442695
    %v755 = vpow.pop %v754
    %v756 = vmul.f32 %v751, 1.442695
    %v757 = vpow.pop %v756
    %v758 = vmul.f32 %v752, 1.442695
    %v759 = vpow.pop %v758
    %v760 = vmul.f32 %v753, 1.442695
    %v761 = vpow.pop %v760
    %v762 = vsel %vm737, %v755, 0.0
    %763 = vadd.xlane.f32.xlu0 %v762
    %v764 = vpop.xlane.xlu0 %763
    %v765 = vsel %vm737, %v757, 0.0
    %766 = vadd.xlane.f32.xlu0 %v765
    %v767 = vpop.xlane.xlu0 %766
    %v768 = vsel %vm737, %v759, 0.0
    %769 = vadd.xlane.f32.xlu0 %v768
    %v770 = vpop.xlane.xlu0 %769
    %v771 = vsel %vm737, %v761, 0.0
    %772 = vadd.xlane.f32.xlu0 %v771
    %v773 = vpop.xlane.xlu0 %772
    %v774 = vlog2.pop %v764
    %v775 = vmul.f32 %v774, 0.6931472
    %v776 = vlog2.pop %v767
    %v777 = vmul.f32 %v776, 0.6931472
    %v778 = vlog2.pop %v770
    %v779 = vmul.f32 %v778, 0.6931472
    %v780 = vlog2.pop %v773
    %v781 = vmul.f32 %v780, 0.6931472
    %v782 = vsub.f32 %v750, %v775
    %v783 = vsub.f32 %v751, %v777
    %v784 = vsub.f32 %v752, %v779
    %v785 = vsub.f32 %v753, %v781
    %786 = vst.msk [vmem:[#allocation7] sm:$0xff] %vm737, %v782
    %787 = vst.msk [vmem:[#allocation7 + $0x8] sm:$0xff] %vm737, %v783
    %788 = vst.msk [vmem:[#allocation7 + $0x10] sm:$0xff] %vm737, %v784
    %789 = vst.msk [vmem:[#allocation7 + $0x18] sm:$0xff] %vm737, %v785
    // Predicated region
    $region14: #{lstm_forward.1} parent=1 // pred_check
      _
    $region15: #{lstm_forward.1} parent=1 // pred_check_branch
      %791 = sbr.rel (0) target = $region17
    $region16: #{lstm_forward.1} parent=1 // pred_region
      %793 = vsyncadd [#allocation6], 0
      %s794 = sshll.u32 [#allocation7], 4
      %s795 = int_to_ptr.vmem [resolvable:$true] %s794
      %s796 = sshll.u32 %s2, 4
      %s797 = int_to_ptr.hbm [resolvable:$true] %s796
      %802 = dma.vmem_to_hbm [thread:$0]  %s795, 512, %s797, [#allocation6], 128, 128, 8
    $region17: #{lstm_forward.1} parent=1 // pred_fallthru
      _
    // Predicated region
    $region18: #{lstm_forward.1} parent=1 // pred_check
      _
    $region19: #{lstm_forward.1} parent=1 // pred_check_branch
      %804 = sbr.rel (0) target = $region21
    $region20: #{lstm_forward.1} parent=1 // pred_region
      %806 = dma.done [#allocation6], 512
    $region21: #{lstm_forward.1} parent=1 // pred_fallthru
      _
    %807 = vsyncpa [#allocation5], 1
    %808 = vsyncpa [#allocation6], 1

</llo_original>
